<compile_context>
chip_gen: v5e
topology: v5e:2x2
jax: 0.10.0
libtpu: 0.0.40
codegen_flags: <defaults>
</compile_context>

<pallas_src>
import functools

import jax
import jax.numpy as jnp
import numpy as np
from jax import lax
from jax.experimental import pallas as pl
from jax.experimental.pallas import tpu as pltpu


def _sla_kernel(x_ref, wqkv_ref, wout_ref, bout_ref, hmask_ref, o_ref, *,
                heads, dim_head, scale, tb, n_valid, n_pad, dot_dtype):
    """One grid step = TB (batch*frame) slices.

    x_ref     : (TB, C, Np)       input channels x padded spatial
    wqkv_ref  : (3*hidden, C)     to_qkv 1x1 conv weight (no bias)
    wout_ref  : (C, hidden)       to_out 1x1 conv weight
    bout_ref  : (C, 1)            to_out bias
    hmask_ref : (hidden, hidden)  1.0 where row/col belong to the same head
    o_ref     : (TB, C, Np)       output
    """
    hidden = heads * dim_head
    c = wout_ref.shape[0]

    # Loop invariants: load / broadcast once per grid step (not per frame).
    wqkv = wqkv_ref[...].astype(dot_dtype)                           # (3h, C)
    wout = wout_ref[...].astype(dot_dtype)                           # (C, h*d)
    head_mask = hmask_ref[...]                                       # (h*d, h*d)
    bias = jnp.broadcast_to(bout_ref[...], (c, n_pad)).astype(jnp.float32)

    if n_pad != n_valid:
        lane_ids = lax.broadcasted_iota(jnp.int32, (hidden, n_pad), 1)
        k_valid = lane_ids < n_valid          # mask padded spatial lanes
    else:
        k_valid = None

    # Static choice of contraction order for the fused to_out projection:
    #   A: (ctx @ q) then (W_out @ .)  -> hidden*Np*(hidden + C) MACs
    #   B: (W_out @ ctx) then (. @ q)  -> C*hidden*(hidden + Np) MACs
    out_proj_first = c * n_pad < hidden * hidden

    def frame(t, carry):
        x = x_ref[t].astype(dot_dtype)                               # (C, Np)
        # qkv projection: 1x1 conv == channel matmul (MXU), f32 accumulation.
        qkv = jnp.dot(wqkv, x, preferred_element_type=jnp.float32)   # (3h, Np)
        q = qkv[:hidden]                                             # (h*d, Np)
        k = qkv[hidden:2 * hidden]
        v = qkv[2 * hidden:]

        # q: per-head softmax over the head-dim axis (torch dim=-2), * scale.
        # Segmented reduction via (heads, d, Np) view; divide goes to the EUP.
        q3 = q.reshape(heads, dim_head, n_pad)
        q3 = jnp.exp(q3 - jnp.max(q3, axis=1, keepdims=True))
        q3 = q3 * (pl.reciprocal(jnp.sum(q3, axis=1, keepdims=True),
                                 approx=True) * scale)
        q = q3.reshape(hidden, n_pad).astype(dot_dtype)

        # k: softmax over the spatial axis (torch dim=-1); padding masked out.
        if k_valid is not None:
            k = jnp.where(k_valid, k, -jnp.inf)
        k = jnp.exp(k - jnp.max(k, axis=-1, keepdims=True))
        k = (k * pl.reciprocal(jnp.sum(k, axis=-1, keepdims=True),
                               approx=True)).astype(dot_dtype)

        # full[h*d+e, h'*d+d'] = sum_n v[h,e,n] * k[h',d',n].
        # Its block-diagonal (same-head) blocks are context^T per head; the
        # head mask zeroes cross-head terms so one 128-wide matmul replaces
        # `heads` 32-wide ones (no materialized transpose either).
        full = lax.dot_general(
            v.astype(dot_dtype), k,
            dimension_numbers=(((1,), (1,)), ((), ())),
            preferred_element_type=jnp.float32)                      # (h*d, h*d)
        ctx_t = (full * head_mask).astype(dot_dtype)

        if out_proj_first:
            # (W_out @ ctx_t) @ q  — cheaper when C * Np < hidden^2.
            w_ctx = jnp.dot(wout, ctx_t,
                            preferred_element_type=jnp.float32)      # (C, h*d)
            y = jnp.dot(w_ctx.astype(dot_dtype), q,
                        preferred_element_type=jnp.float32) + bias   # (C, Np)
        else:
            # ctx_t @ q  (per-head out, stacked h-major) then to_out.
            out = jnp.dot(ctx_t, q,
                          preferred_element_type=jnp.float32)        # (h*d, Np)
            y = jnp.dot(wout, out.astype(dot_dtype),
                        preferred_element_type=jnp.float32) + bias   # (C, Np)

        o_ref[t] = y.astype(o_ref.dtype)
        return carry

    lax.fori_loop(0, tb, frame, 0, unroll=True if tb <= 8 else 8)


def _round_up(x, m):
    return (x + m - 1) // m * m


def _choose_tb(B, c, n_pad):
    """Frames per grid step: large enough to amortize the ~0.35us/step grid
    overhead and get efficiently sized DMAs, small enough that the
    double-buffered in/out blocks stay well inside v7x's 64 MiB VMEM."""
    bytes_per_frame = 2 * c * n_pad * 4                 # x + out, f32
    tb = max(1, min(B, (1 << 20) // max(bytes_per_frame, 1)))
    tb = min(tb, 64)
    # Keep >= 2 grid steps (when B allows it) so both v7x TensorCores get work.
    while tb > 1 and -(-B // tb) < 2:
        tb = (tb + 1) // 2
    return tb


def spatial_linear_attention(x, wqkv, wout, bout, *, heads, dim_head,
                             dot_dtype=jnp.float32):
    """x: (b, c, f, H, W) float32 -> (b, c, f, H, W) float32.

    dot_dtype=jnp.bfloat16 halves MXU/DMA bytes on v6e/v7x (softmax math and
    accumulation stay in f32); the default f32 keeps exact parity with the
    reference module.
    """
    b, c, f, H, W = x.shape
    n = H * W
    hidden = heads * dim_head
    scale = dim_head ** -0.5
    B = b * f

    n_pad = _round_up(n, 128)            # lane-dense, unmasked vst
    tb = _choose_tb(B, c, n_pad)
    nb = -(-B // tb)
    B_pad = nb * tb

    # 'b c f h w -> (b f) c (h w)', then pad spatial / batch.
    xf = jnp.transpose(x, (0, 2, 1, 3, 4)).reshape(B, c, n)
    if n_pad != n or B_pad != B:
        xf = jnp.pad(xf, ((0, B_pad - B), (0, 0), (0, n_pad - n)))

    # Block-diagonal head mask, built host-side (avoids in-kernel int division).
    hm = (np.arange(hidden)[:, None] // dim_head ==
          np.arange(hidden)[None, :] // dim_head).astype(np.float32)
    head_mask = jnp.asarray(hm)

    kernel = functools.partial(
        _sla_kernel, heads=heads, dim_head=dim_head, scale=scale,
        tb=tb, n_valid=n, n_pad=n_pad, dot_dtype=dot_dtype)

    # Explicit VMEM budget: double-buffered in/out blocks + weights/mask +
    # headroom for the qkv/full intermediates, clamped under v7x's 64 MiB.
    block_bytes = tb * c * n_pad * 4
    weight_bytes = (3 * hidden * c + c * hidden + c + hidden * hidden) * 4
    est = (4 * block_bytes + 2 * weight_bytes
           + 4 * (3 * hidden * n_pad * 4) + 2 * hidden * hidden * 4)
    vmem_limit = int(min(max(est + (4 << 20), 16 << 20), 48 << 20))

    out = pl.pallas_call(
        kernel,
        out_shape=jax.ShapeDtypeStruct((B_pad, c, n_pad), x.dtype),
        grid_spec=pltpu.PrefetchScalarGridSpec(
            num_scalar_prefetch=0,
            grid=(nb,),
            in_specs=[
                pl.BlockSpec((tb, c, n_pad), lambda i: (i, 0, 0)),      # x block
                pl.BlockSpec((3 * hidden, c), lambda i: (0, 0)),        # W_qkv
                pl.BlockSpec((c, hidden), lambda i: (0, 0)),            # W_out
                pl.BlockSpec((c, 1), lambda i: (0, 0)),                 # b_out
                pl.BlockSpec((hidden, hidden), lambda i: (0, 0)),       # head mask
            ],
            out_specs=pl.BlockSpec((tb, c, n_pad), lambda i: (i, 0, 0)),
        ),
        compiler_params=pltpu.CompilerParams(
            dimension_semantics=("parallel",),
            vmem_limit_bytes=vmem_limit),
    )(xf, wqkv, wout, bout, head_mask)

    out = out[:B, :, :n]
    # '(b f) c (h w) -> b c f h w'
    return out.reshape(b, f, c, H, W).transpose(0, 2, 1, 3, 4)


def reference_forward(x, wqkv, wout, bout, *, heads, dim_head):
    """Pure-JAX reference mirroring the PyTorch module semantics."""
    b, c, f, H, W = x.shape
    n = H * W
    hidden = heads * dim_head
    scale = dim_head ** -0.5

    xf = jnp.transpose(x, (0, 2, 1, 3, 4)).reshape(b * f, c, n)          # (B, c, n)
    qkv = jnp.einsum('oc,bcn->bon', wqkv, xf)                            # (B, 3*hidden, n)
    q, k, v = jnp.split(qkv, 3, axis=1)
    q = q.reshape(b * f, heads, dim_head, n)
    k = k.reshape(b * f, heads, dim_head, n)
    v = v.reshape(b * f, heads, dim_head, n)
    q = jax.nn.softmax(q, axis=-2) * scale
    k = jax.nn.softmax(k, axis=-1)
    context = jnp.einsum('bhdn,bhen->bhde', k, v)
    out = jnp.einsum('bhde,bhdn->bhen', context, q)
    out = out.reshape(b * f, hidden, n)
    y = jnp.einsum('oc,bcn->bon', wout, out) + bout[None, :, :]
    return y.reshape(b, f, c, H, W).transpose(0, 2, 1, 3, 4)


if __name__ == "__main__":
    # Small, module-consistent shapes.
    b, dim, f, H, W = 2, 4, 2, 8, 16      # x: (b, c, f, h, w)
    heads, dim_head = 4, 32
    hidden = heads * dim_head

    key = jax.random.PRNGKey(0)
    k1, k2, k3, kx = jax.random.split(key, 4)
    wqkv = jax.random.normal(k1, (3 * hidden, dim), dtype=jnp.float32) * 0.1
    wout = jax.random.normal(k2, (dim, hidden), dtype=jnp.float32) * 0.1
    bout = jax.random.normal(k3, (dim, 1), dtype=jnp.float32) * 0.1
    x = jax.random.normal(kx, (b, dim, f, H, W), dtype=jnp.float32)

    y = spatial_linear_attention(x, wqkv, wout, bout,
                                 heads=heads, dim_head=dim_head)
    y = jax.block_until_ready(y)

    y_ref = reference_forward(x, wqkv, wout, bout,
                              heads=heads, dim_head=dim_head)
    # Tolerance accounts for the EUP approximate-reciprocal softmax denominators.
    np.testing.assert_allclose(np.asarray(y), np.asarray(y_ref),
                               rtol=2e-3, atol=2e-3)
    print("KERNEL_OK")
</pallas_src>

<mosaic_0001>
module attributes {stable_mosaic.version = 11 : i64} {
  func.func @_sla_kernel(%arg0: i32, %arg1: memref<2x4x128xf32, #tpu.memory_space<vmem>>, %arg2: memref<384x4xf32, #tpu.memory_space<vmem>>, %arg3: memref<4x128xf32, #tpu.memory_space<vmem>>, %arg4: memref<4x1xf32, #tpu.memory_space<vmem>>, %arg5: memref<128x128xf32, #tpu.memory_space<vmem>>, %arg6: memref<2x4x128xf32, #tpu.memory_space<vmem>>) attributes {dimension_semantics = [#tpu.dimension_semantics<parallel>], iteration_bounds = array<i64: 2>, scalar_prefetch = 0 : i64, scratch_operands = 0 : i64, tpu.core_type = #tpu.core_type<tc>, window_params = [{transform_indices = @transform_0, window_bounds = array<i64: 2, 4, 128>}, {pipeline_mode = #tpu.pipeline_mode<synchronous>, transform_indices = @transform_1, window_bounds = array<i64: 384, 4>}, {pipeline_mode = #tpu.pipeline_mode<synchronous>, transform_indices = @transform_2, window_bounds = array<i64: 4, 128>}, {pipeline_mode = #tpu.pipeline_mode<synchronous>, transform_indices = @transform_3, window_bounds = array<i64: 4, 1>}, {pipeline_mode = #tpu.pipeline_mode<synchronous>, transform_indices = @transform_4, window_bounds = array<i64: 128, 128>}, {transform_indices = @transform_5, window_bounds = array<i64: 2, 4, 128>}]} {
    %c0 = arith.constant 0 : index
    %c0_0 = arith.constant 0 : index
    %0 = vector.load %arg2[%c0, %c0_0] : memref<384x4xf32, #tpu.memory_space<vmem>>, vector<384x4xf32>
    %c0_1 = arith.constant 0 : index
    %c0_2 = arith.constant 0 : index
    %1 = vector.load %arg3[%c0_1, %c0_2] : memref<4x128xf32, #tpu.memory_space<vmem>>, vector<4x128xf32>
    %c0_3 = arith.constant 0 : index
    %c0_4 = arith.constant 0 : index
    %2 = vector.load %arg5[%c0_3, %c0_4] : memref<128x128xf32, #tpu.memory_space<vmem>>, vector<128x128xf32>
    %c0_5 = arith.constant 0 : index
    %c0_6 = arith.constant 0 : index
    %3 = vector.load %arg4[%c0_5, %c0_6] : memref<4x1xf32, #tpu.memory_space<vmem>>, vector<4x1xf32>
    %4 = vector.shape_cast %3 : vector<4x1xf32> to vector<4x1xf32>
    %5 = vector.broadcast %4 : vector<4x1xf32> to vector<4x128xf32>
    %c0_i32 = arith.constant 0 : i32
    %6 = arith.index_cast %c0_i32 : i32 to index
    %c0_7 = arith.constant 0 : index
    %c0_8 = arith.constant 0 : index
    %7 = vector.load %arg1[%6, %c0_7, %c0_8] : memref<2x4x128xf32, #tpu.memory_space<vmem>>, vector<1x4x128xf32>
    %8 = vector.shape_cast %7 : vector<1x4x128xf32> to vector<4x128xf32>
    %cst = arith.constant dense<0.000000e+00> : vector<384x128xf32>
    %9 = tpu.matmul %0, %8, %cst {dimension_numbers = #tpu.dot_dimension_numbers<[1], [0], [0], [1], [0, 0, 1, 1], [], []>} : vector<384x4xf32>, vector<4x128xf32>, vector<384x128xf32> -> vector<384x128xf32>
    %10 = vector.extract_strided_slice %9 {offsets = [0, 0], sizes = [128, 128], strides = [1, 1]} : vector<384x128xf32> to vector<128x128xf32>
    %11 = vector.extract_strided_slice %9 {offsets = [128, 0], sizes = [128, 128], strides = [1, 1]} : vector<384x128xf32> to vector<128x128xf32>
    %12 = vector.extract_strided_slice %9 {offsets = [256, 0], sizes = [128, 128], strides = [1, 1]} : vector<384x128xf32> to vector<128x128xf32>
    %13 = vector.shape_cast %10 : vector<128x128xf32> to vector<4x32x128xf32>
    %cst_9 = arith.constant dense<0xFF800000> : vector<4x128xf32>
    %14 = vector.multi_reduction <maximumf>, %13, %cst_9 [1] : vector<4x32x128xf32> to vector<4x128xf32>
    %15 = vector.shape_cast %14 : vector<4x128xf32> to vector<4x1x128xf32>
    %16 = vector.broadcast %15 : vector<4x1x128xf32> to vector<4x32x128xf32>
    %17 = arith.subf %13, %16 : vector<4x32x128xf32>
    %18 = math.exp %17 : vector<4x32x128xf32>
    %cst_10 = arith.constant dense<0.000000e+00> : vector<4x128xf32>
    %19 = vector.multi_reduction <add>, %18, %cst_10 [1] : vector<4x32x128xf32> to vector<4x128xf32>
    %20 = vector.shape_cast %19 : vector<4x128xf32> to vector<4x1x128xf32>
    %21 = tpu.reciprocal %20 {approx = true} : vector<4x1x128xf32> -> vector<4x1x128xf32>
    %cst_11 = arith.constant 0.176776692 : f32
    %22 = vector.broadcast %cst_11 : f32 to vector<4x1x128xf32>
    %23 = arith.mulf %21, %22 : vector<4x1x128xf32>
    %24 = vector.broadcast %23 : vector<4x1x128xf32> to vector<4x32x128xf32>
    %25 = arith.mulf %18, %24 : vector<4x32x128xf32>
    %26 = vector.shape_cast %25 : vector<4x32x128xf32> to vector<128x128xf32>
    %cst_12 = arith.constant dense<0xFF800000> : vector<128xf32>
    %27 = vector.multi_reduction <maximumf>, %11, %cst_12 [1] : vector<128x128xf32> to vector<128xf32>
    %28 = vector.shape_cast %27 : vector<128xf32> to vector<128x1xf32>
    %29 = vector.broadcast %28 : vector<128x1xf32> to vector<128x128xf32>
    %30 = arith.subf %11, %29 : vector<128x128xf32>
    %31 = math.exp %30 : vector<128x128xf32>
    %cst_13 = arith.constant dense<0.000000e+00> : vector<128xf32>
    %32 = vector.multi_reduction <add>, %31, %cst_13 [1] : vector<128x128xf32> to vector<128xf32>
    %33 = vector.shape_cast %32 : vector<128xf32> to vector<128x1xf32>
    %34 = tpu.reciprocal %33 {approx = true} : vector<128x1xf32> -> vector<128x1xf32>
    %35 = vector.broadcast %34 : vector<128x1xf32> to vector<128x128xf32>
    %36 = arith.mulf %31, %35 : vector<128x128xf32>
    %cst_14 = arith.constant dense<0.000000e+00> : vector<128x128xf32>
    %37 = tpu.matmul %12, %36, %cst_14 {dimension_numbers = #tpu.dot_dimension_numbers<[1], [1], [0], [0], [0, 0, 1, 0], [], []>} : vector<128x128xf32>, vector<128x128xf32>, vector<128x128xf32> -> vector<128x128xf32>
    %38 = arith.mulf %37, %2 : vector<128x128xf32>
    %cst_15 = arith.constant dense<0.000000e+00> : vector<4x128xf32>
    %39 = tpu.matmul %1, %38, %cst_15 {dimension_numbers = #tpu.dot_dimension_numbers<[1], [0], [0], [1], [0, 0, 1, 1], [], []>} : vector<4x128xf32>, vector<128x128xf32>, vector<4x128xf32> -> vector<4x128xf32>
    %cst_16 = arith.constant dense<0.000000e+00> : vector<4x128xf32>
    %40 = tpu.matmul %39, %26, %cst_16 {dimension_numbers = #tpu.dot_dimension_numbers<[1], [0], [0], [1], [0, 0, 1, 1], [], []>} : vector<4x128xf32>, vector<128x128xf32>, vector<4x128xf32> -> vector<4x128xf32>
    %41 = arith.addf %40, %5 : vector<4x128xf32>
    %42 = arith.index_cast %c0_i32 : i32 to index
    %c0_17 = arith.constant 0 : index
    %c0_18 = arith.constant 0 : index
    %43 = vector.load %arg6[%42, %c0_17, %c0_18] : memref<2x4x128xf32, #tpu.memory_space<vmem>>, vector<1x4x128xf32>
    %44 = vector.shape_cast %43 : vector<1x4x128xf32> to vector<4x128xf32>
    %45 = vector.shape_cast %41 : vector<4x128xf32> to vector<1x4x128xf32>
    tpu.vector_store %arg6[%42, %c0_17, %c0_18], %45 {strides = array<i32>} : memref<2x4x128xf32, #tpu.memory_space<vmem>>, vector<1x4x128xf32>,
    %c1_i32 = arith.constant 1 : i32
    %46 = arith.index_cast %c1_i32 : i32 to index
    %c0_19 = arith.constant 0 : index
    %c0_20 = arith.constant 0 : index
    %47 = vector.load %arg1[%46, %c0_19, %c0_20] : memref<2x4x128xf32, #tpu.memory_space<vmem>>, vector<1x4x128xf32>
    %48 = vector.shape_cast %47 : vector<1x4x128xf32> to vector<4x128xf32>
    %cst_21 = arith.constant dense<0.000000e+00> : vector<384x128xf32>
    %49 = tpu.matmul %0, %48, %cst_21 {dimension_numbers = #tpu.dot_dimension_numbers<[1], [0], [0], [1], [0, 0, 1, 1], [], []>} : vector<384x4xf32>, vector<4x128xf32>, vector<384x128xf32> -> vector<384x128xf32>
    %50 = vector.extract_strided_slice %49 {offsets = [0, 0], sizes = [128, 128], strides = [1, 1]} : vector<384x128xf32> to vector<128x128xf32>
    %51 = vector.extract_strided_slice %49 {offsets = [128, 0], sizes = [128, 128], strides = [1, 1]} : vector<384x128xf32> to vector<128x128xf32>
    %52 = vector.extract_strided_slice %49 {offsets = [256, 0], sizes = [128, 128], strides = [1, 1]} : vector<384x128xf32> to vector<128x128xf32>
    %53 = vector.shape_cast %50 : vector<128x128xf32> to vector<4x32x128xf32>
    %cst_22 = arith.constant dense<0xFF800000> : vector<4x128xf32>
    %54 = vector.multi_reduction <maximumf>, %53, %cst_22 [1] : vector<4x32x128xf32> to vector<4x128xf32>
    %55 = vector.shape_cast %54 : vector<4x128xf32> to vector<4x1x128xf32>
    %56 = vector.broadcast %55 : vector<4x1x128xf32> to vector<4x32x128xf32>
    %57 = arith.subf %53, %56 : vector<4x32x128xf32>
    %58 = math.exp %57 : vector<4x32x128xf32>
    %cst_23 = arith.constant dense<0.000000e+00> : vector<4x128xf32>
    %59 = vector.multi_reduction <add>, %58, %cst_23 [1] : vector<4x32x128xf32> to vector<4x128xf32>
    %60 = vector.shape_cast %59 : vector<4x128xf32> to vector<4x1x128xf32>
    %61 = tpu.reciprocal %60 {approx = true} : vector<4x1x128xf32> -> vector<4x1x128xf32>
    %cst_24 = arith.constant 0.176776692 : f32
    %62 = vector.broadcast %cst_24 : f32 to vector<4x1x128xf32>
    %63 = arith.mulf %61, %62 : vector<4x1x128xf32>
    %64 = vector.broadcast %63 : vector<4x1x128xf32> to vector<4x32x128xf32>
    %65 = arith.mulf %58, %64 : vector<4x32x128xf32>
    %66 = vector.shape_cast %65 : vector<4x32x128xf32> to vector<128x128xf32>
    %cst_25 = arith.constant dense<0xFF800000> : vector<128xf32>
    %67 = vector.multi_reduction <maximumf>, %51, %cst_25 [1] : vector<128x128xf32> to vector<128xf32>
    %68 = vector.shape_cast %67 : vector<128xf32> to vector<128x1xf32>
    %69 = vector.broadcast %68 : vector<128x1xf32> to vector<128x128xf32>
    %70 = arith.subf %51, %69 : vector<128x128xf32>
    %71 = math.exp %70 : vector<128x128xf32>
    %cst_26 = arith.constant dense<0.000000e+00> : vector<128xf32>
    %72 = vector.multi_reduction <add>, %71, %cst_26 [1] : vector<128x128xf32> to vector<128xf32>
    %73 = vector.shape_cast %72 : vector<128xf32> to vector<128x1xf32>
    %74 = tpu.reciprocal %73 {approx = true} : vector<128x1xf32> -> vector<128x1xf32>
    %75 = vector.broadcast %74 : vector<128x1xf32> to vector<128x128xf32>
    %76 = arith.mulf %71, %75 : vector<128x128xf32>
    %cst_27 = arith.constant dense<0.000000e+00> : vector<128x128xf32>
    %77 = tpu.matmul %52, %76, %cst_27 {dimension_numbers = #tpu.dot_dimension_numbers<[1], [1], [0], [0], [0, 0, 1, 0], [], []>} : vector<128x128xf32>, vector<128x128xf32>, vector<128x128xf32> -> vector<128x128xf32>
    %78 = arith.mulf %77, %2 : vector<128x128xf32>
    %cst_28 = arith.constant dense<0.000000e+00> : vector<4x128xf32>
    %79 = tpu.matmul %1, %78, %cst_28 {dimension_numbers = #tpu.dot_dimension_numbers<[1], [0], [0], [1], [0, 0, 1, 1], [], []>} : vector<4x128xf32>, vector<128x128xf32>, vector<4x128xf32> -> vector<4x128xf32>
    %cst_29 = arith.constant dense<0.000000e+00> : vector<4x128xf32>
    %80 = tpu.matmul %79, %66, %cst_29 {dimension_numbers = #tpu.dot_dimension_numbers<[1], [0], [0], [1], [0, 0, 1, 1], [], []>} : vector<4x128xf32>, vector<128x128xf32>, vector<4x128xf32> -> vector<4x128xf32>
    %81 = arith.addf %80, %5 : vector<4x128xf32>
    %82 = arith.index_cast %c1_i32 : i32 to index
    %c0_30 = arith.constant 0 : index
    %c0_31 = arith.constant 0 : index
    %83 = vector.load %arg6[%82, %c0_30, %c0_31] : memref<2x4x128xf32, #tpu.memory_space<vmem>>, vector<1x4x128xf32>
    %84 = vector.shape_cast %83 : vector<1x4x128xf32> to vector<4x128xf32>
    %85 = vector.shape_cast %81 : vector<4x128xf32> to vector<1x4x128xf32>
    tpu.vector_store %arg6[%82, %c0_30, %c0_31], %85 {strides = array<i32>} : memref<2x4x128xf32, #tpu.memory_space<vmem>>, vector<1x4x128xf32>,
    %c2_i32 = arith.constant 2 : i32
    return
  }
  func.func @transform_0(%arg0: i32) -> (i32, i32, i32) {
    %c0_i32 = arith.constant 0 : i32
    %c0_i32_0 = arith.constant 0 : i32
    %c0_i32_1 = arith.constant 0 : i32
    return %arg0, %c0_i32, %c0_i32_0 : i32, i32, i32
  }
  func.func @transform_1(%arg0: i32) -> (i32, i32) {
    %c0_i32 = arith.constant 0 : i32
    %c0_i32_0 = arith.constant 0 : i32
    %c0_i32_1 = arith.constant 0 : i32
    return %c0_i32, %c0_i32_0 : i32, i32
  }
  func.func @transform_2(%arg0: i32) -> (i32, i32) {
    %c0_i32 = arith.constant 0 : i32
    %c0_i32_0 = arith.constant 0 : i32
    %c0_i32_1 = arith.constant 0 : i32
    return %c0_i32, %c0_i32_0 : i32, i32
  }
  func.func @transform_3(%arg0: i32) -> (i32, i32) {
    %c0_i32 = arith.constant 0 : i32
    %c0_i32_0 = arith.constant 0 : i32
    %c0_i32_1 = arith.constant 0 : i32
    return %c0_i32, %c0_i32_0 : i32, i32
  }
  func.func @transform_4(%arg0: i32) -> (i32, i32) {
    %c0_i32 = arith.constant 0 : i32
    %c0_i32_0 = arith.constant 0 : i32
    %c0_i32_1 = arith.constant 0 : i32
    return %c0_i32, %c0_i32_0 : i32, i32
  }
  func.func @transform_5(%arg0: i32) -> (i32, i32, i32) {
    %c0_i32 = arith.constant 0 : i32
    %c0_i32_0 = arith.constant 0 : i32
    %c0_i32_1 = arith.constant 0 : i32
    return %arg0, %c0_i32, %c0_i32_0 : i32, i32, i32
  }
}

</mosaic_0001>

<llo_original>
// kernel: tpu_custom_call.1
$region0: #{tpu_custom_call.1}
  #allocation0 [shape = 'u32[]', space=smem, size = 0x4, offset = 0x4, fixed_abs, tag = 'smem constant byte address 0x4 - core index']
  #allocation1 [shape = 'u32[72,128]{1,0:T(1,128)}', space=vmem, size = 0x9000, scoped, tag = 'internal scratch']
  %s0 = inlined_call_operand.vmem [shape: f32[4,4,128], index: 0, kind: input, shape index: {}]
  %s1 = inlined_call_operand.vmem [shape: f32[384,4], index: 1, kind: input, shape index: {}]
  %s2 = inlined_call_operand.vmem [shape: f32[4,128], index: 2, kind: input, shape index: {}]
  %s3 = inlined_call_operand.vmem [shape: f32[4,1], index: 3, kind: input, shape index: {}]
  %s4 = inlined_call_operand.vmem [shape: f32[128,128], index: 4, kind: input, shape index: {}]
  %s5 = inlined_call_operand.hbm [shape: f32[4,4,128], index: 5, kind: output, shape index: {}]
  %s6 = sld [smem:[#allocation0]]
  $region53: #{tpu_custom_call.1} parent=0
    _
  %s8 = ssub.s32 1, %s6
  %s9 = scalar_select 0, %s8, %s6
  $region1: #{tpu_custom_call.1} parent=0
    #allocation2 [shape = 'u8[8192]{0}', space=vmem, size = 0x2000, scoped, tag = 'output window, operand 0']
    #allocation3 [shape = 's32[2]{0}', space=sflag, size = 0x8, scoped, tag = 'scoped memory for tpu_custom_call.1']
    %10 = vsyncpa [#allocation3], 0
    %s11 = scalar_lea.sflag [#allocation3], 1
    %12 = vsyncpa %s11, 0
    loop: start=0, step=1, limit=4
    $region2: #{tpu_custom_call.1} parent=1 // loop_pre_header
      _
    $region3: #{tpu_custom_call.1} parent=1 // loop_header
      %s14 = sphi 0, %s18
      %p15 = scmp.ge.s32.totalorder %s14, 4
      %s24 = sphi 0, %s26
      %s27 = sphi 0, %s24
      %s28 = sphi 0, %s27
      %s44 = sphi 0, %s28
      %s48 = sphi 0, %s48
      %s50 = sphi 0, %s48
      %s51 = sphi 0, %s50
      %s65 = sphi 0, %s51
      %s69 = sphi 0, %s69
      %s71 = sphi 0, %s69
      %s72 = sphi 0, %s71
      %s86 = sphi 0, %s72
      %s90 = sphi 0, %s90
      %s92 = sphi 0, %s90
      %s93 = sphi 0, %s92
      %s107 = sphi 0, %s93
      %s111 = sphi 0, %s111
      %s113 = sphi 0, %s111
      %s114 = sphi 0, %s113
      %s128 = sphi 0, %s114
      %s134 = sphi 0, %s136
      %s137 = sphi 0, %s134
      %s138 = sphi 0, %s137
      %s154 = sphi 0, %s138
    $region4: #{tpu_custom_call.1} parent=1 // loop_header_branch
      %17 = sbr.rel (%p15) target = $region8
    $region5: #{tpu_custom_call.1} parent=1 // loop_body
      %s19 = ssub.s32 %s14, 1
      %s20 = ssub.s32 %s14, 2
      %s21 = sadd.s32 %s14, 1
      %s22 = ssub.s32 %s14, %s21
      %p23 = scmp.eq.s32.totalorder %s22, 0
      %s25 = sadd.s32 %s24, 1
      %s26 = scalar_select %p23, %s24, %s25
      %p29 = pneg %p23
      %p30 = scmp.eq.s32.totalorder %s14, 1
      %p31 = por %p29, %p30
      %p32 = scmp.ne.s32.totalorder %s24, %s27
      %p33 = scmp.eq.s32.totalorder %s14, 0
      %p34 = por %p32, %p33
      %p35 = scmp.ne.s32.totalorder %s24, %s27
      %p36 = scmp.eq.s32.totalorder %s19, 1
      %p37 = por %p35, %p36
      %p38 = scmp.ne.s32.totalorder %s27, %s28
      %p39 = scmp.eq.s32.totalorder %s19, 0
      %p40 = por %p38, %p39
      %p41 = scmp.ne.s32.totalorder %s27, %s28
      %p42 = scmp.eq.s32.totalorder %s20, 1
      %p43 = por %p41, %p42
      %p45 = scmp.ne.s32.totalorder %s28, %s44
      %p46 = scmp.eq.s32.totalorder %s20, 0
      %p47 = por %p45, %p46
      %s49 = sadd.s32 %s48, 1
      %p52 = scmp.eq.s32.totalorder %s14, 1
      %p53 = scmp.ne.s32.totalorder %s48, %s50
      %p54 = scmp.eq.s32.totalorder %s14, 0
      %p55 = por %p53, %p54
      %p56 = scmp.ne.s32.totalorder %s48, %s50
      %p57 = scmp.eq.s32.totalorder %s19, 1
      %p58 = por %p56, %p57
      %p59 = scmp.ne.s32.totalorder %s50, %s51
      %p60 = scmp.eq.s32.totalorder %s19, 0
      %p61 = por %p59, %p60
      %p62 = scmp.ne.s32.totalorder %s50, %s51
      %p63 = scmp.eq.s32.totalorder %s20, 1
      %p64 = por %p62, %p63
      %p66 = scmp.ne.s32.totalorder %s51, %s65
      %p67 = scmp.eq.s32.totalorder %s20, 0
      %p68 = por %p66, %p67
      %s70 = sadd.s32 %s69, 1
      %p73 = scmp.eq.s32.totalorder %s14, 1
      %p74 = scmp.ne.s32.totalorder %s69, %s71
      %p75 = scmp.eq.s32.totalorder %s14, 0
      %p76 = por %p74, %p75
      %p77 = scmp.ne.s32.totalorder %s69, %s71
      %p78 = scmp.eq.s32.totalorder %s19, 1
      %p79 = por %p77, %p78
      %p80 = scmp.ne.s32.totalorder %s71, %s72
      %p81 = scmp.eq.s32.totalorder %s19, 0
      %p82 = por %p80, %p81
      %p83 = scmp.ne.s32.totalorder %s71, %s72
      %p84 = scmp.eq.s32.totalorder %s20, 1
      %p85 = por %p83, %p84
      %p87 = scmp.ne.s32.totalorder %s72, %s86
      %p88 = scmp.eq.s32.totalorder %s20, 0
      %p89 = por %p87, %p88
      %s91 = sadd.s32 %s90, 1
      %p94 = scmp.eq.s32.totalorder %s14, 1
      %p95 = scmp.ne.s32.totalorder %s90, %s92
      %p96 = scmp.eq.s32.totalorder %s14, 0
      %p97 = por %p95, %p96
      %p98 = scmp.ne.s32.totalorder %s90, %s92
      %p99 = scmp.eq.s32.totalorder %s19, 1
      %p100 = por %p98, %p99
      %p101 = scmp.ne.s32.totalorder %s92, %s93
      %p102 = scmp.eq.s32.totalorder %s19, 0
      %p103 = por %p101, %p102
      %p104 = scmp.ne.s32.totalorder %s92, %s93
      %p105 = scmp.eq.s32.totalorder %s20, 1
      %p106 = por %p104, %p105
      %p108 = scmp.ne.s32.totalorder %s93, %s107
      %p109 = scmp.eq.s32.totalorder %s20, 0
      %p110 = por %p108, %p109
      %s112 = sadd.s32 %s111, 1
      %p115 = scmp.eq.s32.totalorder %s14, 1
      %p116 = scmp.ne.s32.totalorder %s111, %s113
      %p117 = scmp.eq.s32.totalorder %s14, 0
      %p118 = por %p116, %p117
      %p119 = scmp.ne.s32.totalorder %s111, %s113
      %p120 = scmp.eq.s32.totalorder %s19, 1
      %p121 = por %p119, %p120
      %p122 = scmp.ne.s32.totalorder %s113, %s114
      %p123 = scmp.eq.s32.totalorder %s19, 0
      %p124 = por %p122, %p123
      %p125 = scmp.ne.s32.totalorder %s113, %s114
      %p126 = scmp.eq.s32.totalorder %s20, 1
      %p127 = por %p125, %p126
      %p129 = scmp.ne.s32.totalorder %s114, %s128
      %p130 = scmp.eq.s32.totalorder %s20, 0
      %p131 = por %p129, %p130
      %s132 = ssub.s32 %s14, %s21
      %p133 = scmp.eq.s32.totalorder %s132, 0
      %s135 = sadd.s32 %s134, 1
      %s136 = scalar_select %p133, %s134, %s135
      %p139 = pneg %p133
      %p140 = scmp.eq.s32.totalorder %s14, 1
      %p141 = por %p139, %p140
      %p142 = scmp.ne.s32.totalorder %s134, %s137
      %p143 = scmp.eq.s32.totalorder %s14, 0
      %p144 = por %p142, %p143
      %p145 = scmp.ne.s32.totalorder %s134, %s137
      %p146 = scmp.eq.s32.totalorder %s19, 1
      %p147 = por %p145, %p146
      %p148 = scmp.ne.s32.totalorder %s137, %s138
      %p149 = scmp.eq.s32.totalorder %s19, 0
      %p150 = por %p148, %p149
      %p151 = scmp.ne.s32.totalorder %s137, %s138
      %p152 = scmp.eq.s32.totalorder %s20, 1
      %p153 = por %p151, %p152
      %p155 = scmp.ne.s32.totalorder %s138, %s154
      %p156 = scmp.eq.s32.totalorder %s20, 0
      %p157 = por %p155, %p156
      %p158 = scmp.le.s32.totalorder 1, %s14
      %p159 = scmp.lt.s32.totalorder %s14, 3
      %p160 = pnand %p158, %p159
      %p161 = pneg %p160
      // Predicated region
      $region9: #{tpu_custom_call.1} parent=5 // pred_check
        _
      $region10: #{tpu_custom_call.1} parent=5 // pred_check_branch
        %163 = sbr.rel (%p160) target = $region12
      $region11: #{tpu_custom_call.1} parent=5 // pred_region
        %s164 = ssub.s32 %s14, 1
        // Predicated region
        $region13: #{tpu_custom_call.1} parent=11 // pred_check
          %p165 = pneg %p61
        $region14: #{tpu_custom_call.1} parent=11 // pred_check_branch
          %167 = sbr.rel (%p165) target = $region16
        $region15: #{tpu_custom_call.1} parent=11 // pred_region
          _
        $region16: #{tpu_custom_call.1} parent=11 // pred_fallthru
          _
        // Predicated region
        $region17: #{tpu_custom_call.1} parent=11 // pred_check
          %p168 = pneg %p82
        $region18: #{tpu_custom_call.1} parent=11 // pred_check_branch
          %170 = sbr.rel (%p168) target = $region20
        $region19: #{tpu_custom_call.1} parent=11 // pred_region
          _
        $region20: #{tpu_custom_call.1} parent=11 // pred_fallthru
          _
        // Predicated region
        $region21: #{tpu_custom_call.1} parent=11 // pred_check
          %p171 = pneg %p103
        $region22: #{tpu_custom_call.1} parent=11 // pred_check_branch
          %173 = sbr.rel (%p171) target = $region24
        $region23: #{tpu_custom_call.1} parent=11 // pred_region
          _
        $region24: #{tpu_custom_call.1} parent=11 // pred_fallthru
          _
        // Predicated region
        $region25: #{tpu_custom_call.1} parent=11 // pred_check
          %p174 = pneg %p124
        $region26: #{tpu_custom_call.1} parent=11 // pred_check_branch
          %176 = sbr.rel (%p174) target = $region28
        $region27: #{tpu_custom_call.1} parent=11 // pred_region
          _
        $region28: #{tpu_custom_call.1} parent=11 // pred_fallthru
          _
      $region12: #{tpu_custom_call.1} parent=5 // pred_fallthru
        _
      %p177 = scmp.lt.s32.totalorder %s14, 2
      // Predicated region
      $region29: #{tpu_custom_call.1} parent=5 // pred_check
        %p178 = pneg %p177
      $region30: #{tpu_custom_call.1} parent=5 // pred_check_branch
        %180 = sbr.rel (%p178) target = $region32
      $region31: #{tpu_custom_call.1} parent=5 // pred_region
        // Predicated region
        $region33: #{tpu_custom_call.1} parent=31 // pred_check
          %p181 = pneg %p34
        $region34: #{tpu_custom_call.1} parent=31 // pred_check_branch
          %183 = sbr.rel (%p181) target = $region36
        $region35: #{tpu_custom_call.1} parent=31 // pred_region
          %s184 = smul.u32 2, %s14
          %p185 = scmp.lt.s32.totalorder %s184, 3
          %s186 = scalar_select %p185, %s184, 3
          %s187 = smul.addr %s186, 4
          %s188 = scalar_lea.vmem %s0, %s187
          %s189 = smul.u32 2, %s14
        $region36: #{tpu_custom_call.1} parent=31 // pred_fallthru
          _
      $region32: #{tpu_custom_call.1} parent=5 // pred_fallthru
        _
      %p190 = scmp.le.s32.totalorder 1, %s14
      %p191 = scmp.lt.s32.totalorder %s14, 3
      %p192 = pnand %p190, %p191
      %p193 = pneg %p192
      // Predicated region
      $region37: #{tpu_custom_call.1} parent=5 // pred_check
        _
      $region38: #{tpu_custom_call.1} parent=5 // pred_check_branch
        %195 = sbr.rel (%p192) target = $region40
      $region39: #{tpu_custom_call.1} parent=5 // pred_region
        %s196 = ssub.s32 %s14, 1
        %s197 = smul.u32 2, %s19
        %p198 = scmp.lt.s32.totalorder %s197, 3
        %s199 = scalar_select %p198, %s197, 3
        %s200 = smul.addr %s199, 4
        %s201 = scalar_lea.vmem %s0, %s200
        %p202 = pneg %p40
        %p203 = pneg %p37
        %p204 = pneg %p61
        %p205 = pneg %p58
        %p206 = pneg %p82
        %p207 = pneg %p79
        %p208 = pneg %p103
        %p209 = pneg %p100
        %p210 = pneg %p124
        %p211 = pneg %p121
        %p212 = pneg %p150
        %p213 = pneg %p147
        %s214 = sand.u32 %s137, 1
        %s215 = scalar_lea.sflag [#allocation3], %s214
        %s216 = sand.u32 %s137, 1
        %s217 = smul.addr %s216, 8
        %s218 = scalar_lea.vmem [#allocation2], %s217
        %s219 = smul.u32 2, %s19
        %p220 = scmp.lt.s32.totalorder %s219, 3
        %s221 = scalar_select %p220, %s219, 3
        %s222 = smul.addr %s221, 4
        %s223 = scalar_lea.vmem %s0, %s222
        %s224 = smul.u32 2, %s19
        %s225 = smul.u32 2, %s19
        %v226 = vld [vmem:[%s1] sm:$0xff]
        %v227 = vld [vmem:[%s1 + $0x8] sm:$0xff]
        %v228 = vld [vmem:[%s1 + $0x10] sm:$0xff]
        %v229 = vld [vmem:[%s1 + $0x18] sm:$0xff]
        %v230 = vld [vmem:[%s1 + $0x20] sm:$0xff]
        %v231 = vld [vmem:[%s1 + $0x28] sm:$0xff]
        %v232 = vld [vmem:[%s1 + $0x30] sm:$0xff]
        %v233 = vld [vmem:[%s1 + $0x38] sm:$0xff]
        %v234 = vld [vmem:[%s1 + $0x40] sm:$0xff]
        %v235 = vld [vmem:[%s1 + $0x48] sm:$0xff]
        %v236 = vld [vmem:[%s1 + $0x50] sm:$0xff]
        %v237 = vld [vmem:[%s1 + $0x58] sm:$0xff]
        %v238 = vld [vmem:[%s1 + $0x60] sm:$0xff]
        %v239 = vld [vmem:[%s1 + $0x68] sm:$0xff]
        %v240 = vld [vmem:[%s1 + $0x70] sm:$0xff]
        %v241 = vld [vmem:[%s1 + $0x78] sm:$0xff]
        %v242 = vld [vmem:[%s1 + $0x80] sm:$0xff]
        %v243 = vld [vmem:[%s1 + $0x88] sm:$0xff]
        %v244 = vld [vmem:[%s1 + $0x90] sm:$0xff]
        %v245 = vld [vmem:[%s1 + $0x98] sm:$0xff]
        %v246 = vld [vmem:[%s1 + $0xa0] sm:$0xff]
        %v247 = vld [vmem:[%s1 + $0xa8] sm:$0xff]
        %v248 = vld [vmem:[%s1 + $0xb0] sm:$0xff]
        %v249 = vld [vmem:[%s1 + $0xb8] sm:$0xff]
        %v250 = vld [vmem:[%s1 + $0xc0] sm:$0xff]
        %v251 = vld [vmem:[%s1 + $0xc8] sm:$0xff]
        %v252 = vld [vmem:[%s1 + $0xd0] sm:$0xff]
        %v253 = vld [vmem:[%s1 + $0xd8] sm:$0xff]
        %v254 = vld [vmem:[%s1 + $0xe0] sm:$0xff]
        %v255 = vld [vmem:[%s1 + $0xe8] sm:$0xff]
        %v256 = vld [vmem:[%s1 + $0xf0] sm:$0xff]
        %v257 = vld [vmem:[%s1 + $0xf8] sm:$0xff]
        %v258 = vld [vmem:[%s1 + $0x100] sm:$0xff]
        %v259 = vld [vmem:[%s1 + $0x108] sm:$0xff]
        %v260 = vld [vmem:[%s1 + $0x110] sm:$0xff]
        %v261 = vld [vmem:[%s1 + $0x118] sm:$0xff]
        %v262 = vld [vmem:[%s1 + $0x120] sm:$0xff]
        %v263 = vld [vmem:[%s1 + $0x128] sm:$0xff]
        %v264 = vld [vmem:[%s1 + $0x130] sm:$0xff]
        %v265 = vld [vmem:[%s1 + $0x138] sm:$0xff]
        %v266 = vld [vmem:[%s1 + $0x140] sm:$0xff]
        %v267 = vld [vmem:[%s1 + $0x148] sm:$0xff]
        %v268 = vld [vmem:[%s1 + $0x150] sm:$0xff]
        %v269 = vld [vmem:[%s1 + $0x158] sm:$0xff]
        %v270 = vld [vmem:[%s1 + $0x160] sm:$0xff]
        %v271 = vld [vmem:[%s1 + $0x168] sm:$0xff]
        %v272 = vld [vmem:[%s1 + $0x170] sm:$0xff]
        %v273 = vld [vmem:[%s1 + $0x178] sm:$0xff]
        %v274 = vld [vmem:[%s2] sm:$0xf]
        %v275 = vld [vmem:[%s4] sm:$0xff]
        %v276 = vld [vmem:[%s4 + $0x8] sm:$0xff]
        %v277 = vld [vmem:[%s4 + $0x10] sm:$0xff]
        %v278 = vld [vmem:[%s4 + $0x18] sm:$0xff]
        %v279 = vld [vmem:[%s4 + $0x20] sm:$0xff]
        %v280 = vld [vmem:[%s4 + $0x28] sm:$0xff]
        %v281 = vld [vmem:[%s4 + $0x30] sm:$0xff]
        %v282 = vld [vmem:[%s4 + $0x38] sm:$0xff]
        %v283 = vld [vmem:[%s4 + $0x40] sm:$0xff]
        %v284 = vld [vmem:[%s4 + $0x48] sm:$0xff]
        %v285 = vld [vmem:[%s4 + $0x50] sm:$0xff]
        %v286 = vld [vmem:[%s4 + $0x58] sm:$0xff]
        %v287 = vld [vmem:[%s4 + $0x60] sm:$0xff]
        %v288 = vld [vmem:[%s4 + $0x68] sm:$0xff]
        %v289 = vld [vmem:[%s4 + $0x70] sm:$0xff]
        %v290 = vld [vmem:[%s4 + $0x78] sm:$0xff]
        %v291 = vld [vmem:[%s3] sm:$0xf]
        %293 = vset.pattern.permute.xlu0 0
        %294 = vperm.xlu0 %293, %v291
        %v295 = vpop.permute.xlu0 %294
        %v297 = vld [vmem:[%s223] sm:$0xf]
        %vm298 = vcmask 31744
        %v300 = vsel %vm298, %v226, 0
        %v303 = vsel %vm298, %v227, 0
        %v306 = vsel %vm298, %v228, 0
        %v309 = vsel %vm298, %v229, 0
        %v312 = vsel %vm298, %v230, 0
        %v315 = vsel %vm298, %v231, 0
        %v318 = vsel %vm298, %v232, 0
        %v321 = vsel %vm298, %v233, 0
        %v324 = vsel %vm298, %v234, 0
        %v327 = vsel %vm298, %v235, 0
        %v330 = vsel %vm298, %v236, 0
        %v333 = vsel %vm298, %v237, 0
        %v336 = vsel %vm298, %v238, 0
        %v339 = vsel %vm298, %v239, 0
        %v342 = vsel %vm298, %v240, 0
        %v345 = vsel %vm298, %v241, 0
        %v348 = vsel %vm298, %v242, 0
        %v351 = vsel %vm298, %v243, 0
        %v354 = vsel %vm298, %v244, 0
        %v357 = vsel %vm298, %v245, 0
        %v360 = vsel %vm298, %v246, 0
        %v363 = vsel %vm298, %v247, 0
        %v366 = vsel %vm298, %v248, 0
        %v369 = vsel %vm298, %v249, 0
        %v372 = vsel %vm298, %v250, 0
        %v375 = vsel %vm298, %v251, 0
        %v378 = vsel %vm298, %v252, 0
        %v381 = vsel %vm298, %v253, 0
        %v384 = vsel %vm298, %v254, 0
        %v387 = vsel %vm298, %v255, 0
        %v390 = vsel %vm298, %v256, 0
        %v393 = vsel %vm298, %v257, 0
        %v396 = vsel %vm298, %v258, 0
        %v399 = vsel %vm298, %v259, 0
        %v402 = vsel %vm298, %v260, 0
        %v405 = vsel %vm298, %v261, 0
        %v408 = vsel %vm298, %v262, 0
        %v411 = vsel %vm298, %v263, 0
        %v414 = vsel %vm298, %v264, 0
        %v417 = vsel %vm298, %v265, 0
        %v420 = vsel %vm298, %v266, 0
        %v423 = vsel %vm298, %v267, 0
        %v426 = vsel %vm298, %v268, 0
        %v429 = vsel %vm298, %v269, 0
        %v432 = vsel %vm298, %v270, 0
        %v435 = vsel %vm298, %v271, 0
        %v438 = vsel %vm298, %v272, 0
        %v441 = vsel %vm298, %v273, 0
        %vm443 = vcmask 1043456
        %v445 = vsel %vm443, %v297, 0
        %447 = vmatpush.msra.mxu0 0.0
        %448 = vmatpush.msra.mxu0 0.0
        %449 = vmatpush.msra.mxu0 0.0
        %450 = vmatpush.msra.mxu0 0.0
        %451 = vmatpush.msra.mxu0 0.0
        %452 = vmatpush.msra.mxu0 0.0
        %453 = vmatpush.msra.mxu0 0.0
        %454 = vmatpush.msra.mxu0 0.0
        %455 = vmatpush.msra.mxu0 0.0
        %456 = vmatpush.msra.mxu0 0.0
        %457 = vmatpush.msra.mxu0 0.0
        %458 = vmatpush.msra.mxu0 0.0
        %459 = vmatpush.msra.mxu0 0.0
        %460 = vmatpush.msra.mxu0 0.0
        %461 = vmatpush.msra.mxu0 0.0
        %462 = vmatpush.msra.mxu0 %v445
        %463 = vmatmul.f32.gmra.mxu0 %v300
        %v464 = vpop.f32.mrf.mxu0
        %v465 = vadd.f32 0.0, %v464
        %466 = vmatmul.f32.gmra.mxu0 %v303
        %v467 = vpop.f32.mrf.mxu0
        %v468 = vadd.f32 0.0, %v467
        %469 = vmatmul.f32.gmra.mxu0 %v306
        %v470 = vpop.f32.mrf.mxu0
        %v471 = vadd.f32 0.0, %v470
        %472 = vmatmul.f32.gmra.mxu0 %v309
        %v473 = vpop.f32.mrf.mxu0
        %v474 = vadd.f32 0.0, %v473
        %475 = vmatmul.f32.gmra.mxu0 %v312
        %v476 = vpop.f32.mrf.mxu0
        %v477 = vadd.f32 0.0, %v476
        %478 = vmatmul.f32.gmra.mxu0 %v315
        %v479 = vpop.f32.mrf.mxu0
        %v480 = vadd.f32 0.0, %v479
        %481 = vmatmul.f32.gmra.mxu0 %v318
        %v482 = vpop.f32.mrf.mxu0
        %v483 = vadd.f32 0.0, %v482
        %484 = vmatmul.f32.gmra.mxu0 %v321
        %v485 = vpop.f32.mrf.mxu0
        %v486 = vadd.f32 0.0, %v485
        %487 = vmatmul.f32.gmra.mxu0 %v324
        %v488 = vpop.f32.mrf.mxu0
        %v489 = vadd.f32 0.0, %v488
        %490 = vmatmul.f32.gmra.mxu0 %v327
        %v491 = vpop.f32.mrf.mxu0
        %v492 = vadd.f32 0.0, %v491
        %493 = vmatmul.f32.gmra.mxu0 %v330
        %v494 = vpop.f32.mrf.mxu0
        %v495 = vadd.f32 0.0, %v494
        %496 = vmatmul.f32.gmra.mxu0 %v333
        %v497 = vpop.f32.mrf.mxu0
        %v498 = vadd.f32 0.0, %v497
        %499 = vmatmul.f32.gmra.mxu0 %v336
        %v500 = vpop.f32.mrf.mxu0
        %v501 = vadd.f32 0.0, %v500
        %502 = vmatmul.f32.gmra.mxu0 %v339
        %v503 = vpop.f32.mrf.mxu0
        %v504 = vadd.f32 0.0, %v503
        %505 = vmatmul.f32.gmra.mxu0 %v342
        %v506 = vpop.f32.mrf.mxu0
        %v507 = vadd.f32 0.0, %v506
        %508 = vmatmul.f32.gmra.mxu0 %v345
        %v509 = vpop.f32.mrf.mxu0
        %v510 = vadd.f32 0.0, %v509
        %511 = vmatmul.f32.gmra.mxu0 %v348
        %v512 = vpop.f32.mrf.mxu0
        %v513 = vadd.f32 0.0, %v512
        %514 = vmatmul.f32.gmra.mxu0 %v351
        %v515 = vpop.f32.mrf.mxu0
        %v516 = vadd.f32 0.0, %v515
        %517 = vmatmul.f32.gmra.mxu0 %v354
        %v518 = vpop.f32.mrf.mxu0
        %v519 = vadd.f32 0.0, %v518
        %520 = vmatmul.f32.gmra.mxu0 %v357
        %v521 = vpop.f32.mrf.mxu0
        %v522 = vadd.f32 0.0, %v521
        %523 = vmatmul.f32.gmra.mxu0 %v360
        %v524 = vpop.f32.mrf.mxu0
        %v525 = vadd.f32 0.0, %v524
        %526 = vmatmul.f32.gmra.mxu0 %v363
        %v527 = vpop.f32.mrf.mxu0
        %v528 = vadd.f32 0.0, %v527
        %529 = vmatmul.f32.gmra.mxu0 %v366
        %v530 = vpop.f32.mrf.mxu0
        %v531 = vadd.f32 0.0, %v530
        %532 = vmatmul.f32.gmra.mxu0 %v369
        %v533 = vpop.f32.mrf.mxu0
        %v534 = vadd.f32 0.0, %v533
        %535 = vmatmul.f32.gmra.mxu0 %v372
        %v536 = vpop.f32.mrf.mxu0
        %v537 = vadd.f32 0.0, %v536
        %538 = vmatmul.f32.gmra.mxu0 %v375
        %v539 = vpop.f32.mrf.mxu0
        %v540 = vadd.f32 0.0, %v539
        %541 = vmatmul.f32.gmra.mxu0 %v378
        %v542 = vpop.f32.mrf.mxu0
        %v543 = vadd.f32 0.0, %v542
        %544 = vmatmul.f32.gmra.mxu0 %v381
        %v545 = vpop.f32.mrf.mxu0
        %v546 = vadd.f32 0.0, %v545
        %547 = vmatmul.f32.gmra.mxu0 %v384
        %v548 = vpop.f32.mrf.mxu0
        %v549 = vadd.f32 0.0, %v548
        %550 = vmatmul.f32.gmra.mxu0 %v387
        %v551 = vpop.f32.mrf.mxu0
        %v552 = vadd.f32 0.0, %v551
        %553 = vmatmul.f32.gmra.mxu0 %v390
        %v554 = vpop.f32.mrf.mxu0
        %v555 = vadd.f32 0.0, %v554
        %556 = vmatmul.f32.gmra.mxu0 %v393
        %v557 = vpop.f32.mrf.mxu0
        %v558 = vadd.f32 0.0, %v557
        %559 = vmatmul.f32.gmra.mxu0 %v396
        %v560 = vpop.f32.mrf.mxu0
        %v561 = vadd.f32 0.0, %v560
        %562 = vmatmul.f32.gmra.mxu0 %v399
        %v563 = vpop.f32.mrf.mxu0
        %v564 = vadd.f32 0.0, %v563
        %565 = vmatmul.f32.gmra.mxu0 %v402
        %v566 = vpop.f32.mrf.mxu0
        %v567 = vadd.f32 0.0, %v566
        %568 = vmatmul.f32.gmra.mxu0 %v405
        %v569 = vpop.f32.mrf.mxu0
        %v570 = vadd.f32 0.0, %v569
        %571 = vmatmul.f32.gmra.mxu0 %v408
        %v572 = vpop.f32.mrf.mxu0
        %v573 = vadd.f32 0.0, %v572
        %574 = vmatmul.f32.gmra.mxu0 %v411
        %v575 = vpop.f32.mrf.mxu0
        %v576 = vadd.f32 0.0, %v575
        %577 = vmatmul.f32.gmra.mxu0 %v414
        %v578 = vpop.f32.mrf.mxu0
        %v579 = vadd.f32 0.0, %v578
        %580 = vmatmul.f32.gmra.mxu0 %v417
        %v581 = vpop.f32.mrf.mxu0
        %v582 = vadd.f32 0.0, %v581
        %583 = vmatmul.f32.gmra.mxu0 %v420
        %v584 = vpop.f32.mrf.mxu0
        %v585 = vadd.f32 0.0, %v584
        %586 = vmatmul.f32.gmra.mxu0 %v423
        %v587 = vpop.f32.mrf.mxu0
        %v588 = vadd.f32 0.0, %v587
        %589 = vmatmul.f32.gmra.mxu0 %v426
        %v590 = vpop.f32.mrf.mxu0
        %v591 = vadd.f32 0.0, %v590
        %592 = vmatmul.f32.gmra.mxu0 %v429
        %v593 = vpop.f32.mrf.mxu0
        %v594 = vadd.f32 0.0, %v593
        %595 = vmatmul.f32.gmra.mxu0 %v432
        %v596 = vpop.f32.mrf.mxu0
        %v597 = vadd.f32 0.0, %v596
        %598 = vmatmul.f32.gmra.mxu0 %v435
        %v599 = vpop.f32.mrf.mxu0
        %v600 = vadd.f32 0.0, %v599
        %601 = vmatmul.f32.gmra.mxu0 %v438
        %v602 = vpop.f32.mrf.mxu0
        %v603 = vadd.f32 0.0, %v602
        %604 = vmatmul.f32.gmra.mxu0 %v441
        %v605 = vpop.f32.mrf.mxu0
        %v606 = vadd.f32 0.0, %v605
        %607 = vdwg.mxu0
        %v608 = vmax.f32 %v465, %v468
        %v609 = vmax.f32 %v608, %v471
        %v610 = vmax.f32 %v609, %v474
        %v611 = vrot.slane %v610, 4
        %v612 = vmax.f32 %v610, %v611
        %v613 = vrot.slane %v612, 2
        %v614 = vmax.f32 %v612, %v613
        %v615 = vrot.slane %v614, 1
        %v616 = vmax.f32 %v614, %v615
        %v617 = vmax.f32 %v477, %v480
        %v618 = vmax.f32 %v617, %v483
        %v619 = vmax.f32 %v618, %v486
        %v620 = vrot.slane %v619, 4
        %v621 = vmax.f32 %v619, %v620
        %v622 = vrot.slane %v621, 2
        %v623 = vmax.f32 %v621, %v622
        %v624 = vrot.slane %v623, 1
        %v625 = vmax.f32 %v623, %v624
        %v626 = vmax.f32 %v489, %v492
        %v627 = vmax.f32 %v626, %v495
        %v628 = vmax.f32 %v627, %v498
        %v629 = vrot.slane %v628, 4
        %v630 = vmax.f32 %v628, %v629
        %v631 = vrot.slane %v630, 2
        %v632 = vmax.f32 %v630, %v631
        %v633 = vrot.slane %v632, 1
        %v634 = vmax.f32 %v632, %v633
        %v635 = vmax.f32 %v501, %v504
        %v636 = vmax.f32 %v635, %v507
        %v637 = vmax.f32 %v636, %v510
        %v638 = vrot.slane %v637, 4
        %v639 = vmax.f32 %v637, %v638
        %v640 = vrot.slane %v639, 2
        %v641 = vmax.f32 %v639, %v640
        %v642 = vrot.slane %v641, 1
        %v643 = vmax.f32 %v641, %v642
        %v644 = vsub.f32 %v465, %v616
        %v645 = vsub.f32 %v468, %v616
        %v646 = vsub.f32 %v471, %v616
        %v647 = vsub.f32 %v474, %v616
        %v648 = vsub.f32 %v477, %v625
        %v649 = vsub.f32 %v480, %v625
        %v650 = vsub.f32 %v483, %v625
        %v651 = vsub.f32 %v486, %v625
        %v652 = vsub.f32 %v489, %v634
        %v653 = vsub.f32 %v492, %v634
        %v654 = vsub.f32 %v495, %v634
        %v655 = vsub.f32 %v498, %v634
        %v656 = vsub.f32 %v501, %v643
        %v657 = vsub.f32 %v504, %v643
        %v658 = vsub.f32 %v507, %v643
        %v659 = vsub.f32 %v510, %v643
        %v660 = vmul.f32 %v644, 1.442695
        %v661 = vpow.pop %v660
        %v662 = vmul.f32 %v645, 1.442695
        %v663 = vpow.pop %v662
        %v664 = vmul.f32 %v646, 1.442695
        %v665 = vpow.pop %v664
        %v666 = vmul.f32 %v647, 1.442695
        %v667 = vpow.pop %v666
        %v668 = vmul.f32 %v648, 1.442695
        %v669 = vpow.pop %v668
        %v670 = vmul.f32 %v649, 1.442695
        %v671 = vpow.pop %v670
        %v672 = vmul.f32 %v650, 1.442695
        %v673 = vpow.pop %v672
        %v674 = vmul.f32 %v651, 1.442695
        %v675 = vpow.pop %v674
        %v676 = vmul.f32 %v652, 1.442695
        %v677 = vpow.pop %v676
        %v678 = vmul.f32 %v653, 1.442695
        %v679 = vpow.pop %v678
        %v680 = vmul.f32 %v654, 1.442695
        %v681 = vpow.pop %v680
        %v682 = vmul.f32 %v655, 1.442695
        %v683 = vpow.pop %v682
        %v684 = vmul.f32 %v656, 1.442695
        %v685 = vpow.pop %v684
        %v686 = vmul.f32 %v657, 1.442695
        %v687 = vpow.pop %v686
        %v688 = vmul.f32 %v658, 1.442695
        %v689 = vpow.pop %v688
        %v690 = vmul.f32 %v659, 1.442695
        %v691 = vpow.pop %v690
        %v692 = vadd.f32 %v661, %v663
        %v693 = vadd.f32 %v692, %v665
        %v694 = vadd.f32 %v693, %v667
        %v695 = vrot.slane %v694, 4
        %v696 = vadd.f32 %v694, %v695
        %v697 = vrot.slane %v696, 2
        %v698 = vadd.f32 %v696, %v697
        %v699 = vrot.slane %v698, 1
        %v700 = vadd.f32 %v698, %v699
        %v701 = vadd.f32 %v669, %v671
        %v702 = vadd.f32 %v701, %v673
        %v703 = vadd.f32 %v702, %v675
        %v704 = vrot.slane %v703, 4
        %v705 = vadd.f32 %v703, %v704
        %v706 = vrot.slane %v705, 2
        %v707 = vadd.f32 %v705, %v706
        %v708 = vrot.slane %v707, 1
        %v709 = vadd.f32 %v707, %v708
        %v710 = vadd.f32 %v677, %v679
        %v711 = vadd.f32 %v710, %v681
        %v712 = vadd.f32 %v711, %v683
        %v713 = vrot.slane %v712, 4
        %v714 = vadd.f32 %v712, %v713
        %v715 = vrot.slane %v714, 2
        %v716 = vadd.f32 %v714, %v715
        %v717 = vrot.slane %v716, 1
        %v718 = vadd.f32 %v716, %v717
        %v719 = vadd.f32 %v685, %v687
        %v720 = vadd.f32 %v719, %v689
        %v721 = vadd.f32 %v720, %v691
        %v722 = vrot.slane %v721, 4
        %v723 = vadd.f32 %v721, %v722
        %v724 = vrot.slane %v723, 2
        %v725 = vadd.f32 %v723, %v724
        %v726 = vrot.slane %v725, 1
        %v727 = vadd.f32 %v725, %v726
        %v728 = vrcp.pop %v700
        %v729 = vrcp.pop %v709
        %v730 = vrcp.pop %v718
        %v731 = vrcp.pop %v727
        %v732 = vmul.f32 %v728, 0.17677669
        %v733 = vmul.f32 %v729, 0.17677669
        %v734 = vmul.f32 %v730, 0.17677669
        %v735 = vmul.f32 %v731, 0.17677669
        %v736 = vmul.f32 %v661, %v732
        %v737 = vmul.f32 %v663, %v732
        %v738 = vmul.f32 %v665, %v732
        %v739 = vmul.f32 %v667, %v732
        %v740 = vmul.f32 %v669, %v733
        %v741 = vmul.f32 %v671, %v733
        %v742 = vmul.f32 %v673, %v733
        %v743 = vmul.f32 %v675, %v733
        %v744 = vmul.f32 %v677, %v734
        %v745 = vmul.f32 %v679, %v734
        %v746 = vmul.f32 %v681, %v734
        %v747 = vmul.f32 %v683, %v734
        %v748 = vmul.f32 %v685, %v735
        %v749 = vmul.f32 %v687, %v735
        %v750 = vmul.f32 %v689, %v735
        %v751 = vmul.f32 %v691, %v735
        %752 = vmax.xlane.f32.xlu0 %v513
        %v753 = vpop.xlane.xlu0 %752
        %754 = vmax.xlane.f32.xlu0 %v516
        %v755 = vpop.xlane.xlu0 %754
        %756 = vmax.xlane.f32.xlu0 %v519
        %v757 = vpop.xlane.xlu0 %756
        %758 = vmax.xlane.f32.xlu0 %v522
        %v759 = vpop.xlane.xlu0 %758
        %760 = vmax.xlane.f32.xlu0 %v525
        %v761 = vpop.xlane.xlu0 %760
        %762 = vmax.xlane.f32.xlu0 %v528
        %v763 = vpop.xlane.xlu0 %762
        %764 = vmax.xlane.f32.xlu0 %v531
        %v765 = vpop.xlane.xlu0 %764
        %766 = vmax.xlane.f32.xlu0 %v534
        %v767 = vpop.xlane.xlu0 %766
        %768 = vmax.xlane.f32.xlu0 %v537
        %v769 = vpop.xlane.xlu0 %768
        %770 = vmax.xlane.f32.xlu0 %v540
        %v771 = vpop.xlane.xlu0 %770
        %772 = vmax.xlane.f32.xlu0 %v543
        %v773 = vpop.xlane.xlu0 %772
        %774 = vmax.xlane.f32.xlu0 %v546
        %v775 = vpop.xlane.xlu0 %774
        %776 = vmax.xlane.f32.xlu0 %v549
        %v777 = vpop.xlane.xlu0 %776
        %778 = vmax.xlane.f32.xlu0 %v552
        %v779 = vpop.xlane.xlu0 %778
        %780 = vmax.xlane.f32.xlu0 %v555
        %v781 = vpop.xlane.xlu0 %780
        %782 = vmax.xlane.f32.xlu0 %v558
        %v783 = vpop.xlane.xlu0 %782
        %v784 = vsub.f32 %v513, %v753
        %v785 = vsub.f32 %v516, %v755
        %v786 = vsub.f32 %v519, %v757
        %v787 = vsub.f32 %v522, %v759
        %v788 = vsub.f32 %v525, %v761
        %v789 = vsub.f32 %v528, %v763
        %v790 = vsub.f32 %v531, %v765
        %v791 = vsub.f32 %v534, %v767
        %v792 = vsub.f32 %v537, %v769
        %v793 = vsub.f32 %v540, %v771
        %v794 = vsub.f32 %v543, %v773
        %v795 = vsub.f32 %v546, %v775
        %v796 = vsub.f32 %v549, %v777
        %v797 = vsub.f32 %v552, %v779
        %v798 = vsub.f32 %v555, %v781
        %v799 = vsub.f32 %v558, %v783
        %v800 = vmul.f32 %v784, 1.442695
        %v801 = vpow.pop %v800
        %v802 = vmul.f32 %v785, 1.442695
        %v803 = vpow.pop %v802
        %v804 = vmul.f32 %v786, 1.442695
        %v805 = vpow.pop %v804
        %v806 = vmul.f32 %v787, 1.442695
        %v807 = vpow.pop %v806
        %v808 = vmul.f32 %v788, 1.442695
        %v809 = vpow.pop %v808
        %v810 = vmul.f32 %v789, 1.442695
        %v811 = vpow.pop %v810
        %v812 = vmul.f32 %v790, 1.442695
        %v813 = vpow.pop %v812
        %v814 = vmul.f32 %v791, 1.442695
        %v815 = vpow.pop %v814
        %v816 = vmul.f32 %v792, 1.442695
        %v817 = vpow.pop %v816
        %v818 = vmul.f32 %v793, 1.442695
        %v819 = vpow.pop %v818
        %v820 = vmul.f32 %v794, 1.442695
        %v821 = vpow.pop %v820
        %v822 = vmul.f32 %v795, 1.442695
        %v823 = vpow.pop %v822
        %v824 = vmul.f32 %v796, 1.442695
        %v825 = vpow.pop %v824
        %v826 = vmul.f32 %v797, 1.442695
        %v827 = vpow.pop %v826
        %v828 = vmul.f32 %v798, 1.442695
        %v829 = vpow.pop %v828
        %v830 = vmul.f32 %v799, 1.442695
        %v831 = vpow.pop %v830
        %832 = vadd.xlane.f32.xlu0 %v801
        %v833 = vpop.xlane.xlu0 %832
        %834 = vadd.xlane.f32.xlu0 %v803
        %v835 = vpop.xlane.xlu0 %834
        %836 = vadd.xlane.f32.xlu0 %v805
        %v837 = vpop.xlane.xlu0 %836
        %838 = vadd.xlane.f32.xlu0 %v807
        %v839 = vpop.xlane.xlu0 %838
        %840 = vadd.xlane.f32.xlu0 %v809
        %v841 = vpop.xlane.xlu0 %840
        %842 = vadd.xlane.f32.xlu0 %v811
        %v843 = vpop.xlane.xlu0 %842
        %844 = vadd.xlane.f32.xlu0 %v813
        %v845 = vpop.xlane.xlu0 %844
        %846 = vadd.xlane.f32.xlu0 %v815
        %v847 = vpop.xlane.xlu0 %846
        %848 = vadd.xlane.f32.xlu0 %v817
        %v849 = vpop.xlane.xlu0 %848
        %850 = vadd.xlane.f32.xlu0 %v819
        %v851 = vpop.xlane.xlu0 %850
        %852 = vadd.xlane.f32.xlu0 %v821
        %v853 = vpop.xlane.xlu0 %852
        %854 = vadd.xlane.f32.xlu0 %v823
        %v855 = vpop.xlane.xlu0 %854
        %856 = vadd.xlane.f32.xlu0 %v825
        %v857 = vpop.xlane.xlu0 %856
        %858 = vadd.xlane.f32.xlu0 %v827
        %v859 = vpop.xlane.xlu0 %858
        %860 = vadd.xlane.f32.xlu0 %v829
        %v861 = vpop.xlane.xlu0 %860
        %862 = vadd.xlane.f32.xlu0 %v831
        %v863 = vpop.xlane.xlu0 %862
        %v864 = vrcp.pop %v833
        %v865 = vrcp.pop %v835
        %v866 = vrcp.pop %v837
        %v867 = vrcp.pop %v839
        %v868 = vrcp.pop %v841
        %v869 = vrcp.pop %v843
        %v870 = vrcp.pop %v845
        %v871 = vrcp.pop %v847
        %v872 = vrcp.pop %v849
        %v873 = vrcp.pop %v851
        %v874 = vrcp.pop %v853
        %v875 = vrcp.pop %v855
        %v876 = vrcp.pop %v857
        %v877 = vrcp.pop %v859
        %v878 = vrcp.pop %v861
        %v879 = vrcp.pop %v863
        %v880 = vmul.f32 %v801, %v864
        %v881 = vmul.f32 %v803, %v865
        %v882 = vmul.f32 %v805, %v866
        %v883 = vmul.f32 %v807, %v867
        %v884 = vmul.f32 %v809, %v868
        %v885 = vmul.f32 %v811, %v869
        %v886 = vmul.f32 %v813, %v870
        %v887 = vmul.f32 %v815, %v871
        %v888 = vmul.f32 %v817, %v872
        %v889 = vmul.f32 %v819, %v873
        %v890 = vmul.f32 %v821, %v874
        %v891 = vmul.f32 %v823, %v875
        %v892 = vmul.f32 %v825, %v876
        %v893 = vmul.f32 %v827, %v877
        %v894 = vmul.f32 %v829, %v878
        %v895 = vmul.f32 %v831, %v879
        %896 = vmatpush.xpose.msra.mxu0 %v895
        %897 = vmatpush.xpose.msra.mxu0 %v894
        %898 = vmatpush.xpose.msra.mxu0 %v893
        %899 = vmatpush.xpose.msra.mxu0 %v892
        %900 = vmatpush.xpose.msra.mxu0 %v891
        %901 = vmatpush.xpose.msra.mxu0 %v890
        %902 = vmatpush.xpose.msra.mxu0 %v889
        %903 = vmatpush.xpose.msra.mxu0 %v888
        %904 = vmatpush.xpose.msra.mxu0 %v887
        %905 = vmatpush.xpose.msra.mxu0 %v886
        %906 = vmatpush.xpose.msra.mxu0 %v885
        %907 = vmatpush.xpose.msra.mxu0 %v884
        %908 = vmatpush.xpose.msra.mxu0 %v883
        %909 = vmatpush.xpose.msra.mxu0 %v882
        %910 = vmatpush.xpose.msra.mxu0 %v881
        %911 = vmatpush.xpose.msra.mxu0 %v880
        %912 = vmatmul.f32.gmra.mxu0 %v561
        %v913 = vpop.f32.mrf.mxu0
        %v914 = vadd.f32 0.0, %v913
        %915 = vmatmul.f32.gmra.mxu0 %v564
        %v916 = vpop.f32.mrf.mxu0
        %v917 = vadd.f32 0.0, %v916
        %918 = vmatmul.f32.gmra.mxu0 %v567
        %v919 = vpop.f32.mrf.mxu0
        %v920 = vadd.f32 0.0, %v919
        %921 = vmatmul.f32.gmra.mxu0 %v570
        %v922 = vpop.f32.mrf.mxu0
        %v923 = vadd.f32 0.0, %v922
        %924 = vmatmul.f32.gmra.mxu0 %v573
        %v925 = vpop.f32.mrf.mxu0
        %v926 = vadd.f32 0.0, %v925
        %927 = vmatmul.f32.gmra.mxu0 %v576
        %v928 = vpop.f32.mrf.mxu0
        %v929 = vadd.f32 0.0, %v928
        %930 = vmatmul.f32.gmra.mxu0 %v579
        %v931 = vpop.f32.mrf.mxu0
        %v932 = vadd.f32 0.0, %v931
        %933 = vmatmul.f32.gmra.mxu0 %v582
        %v934 = vpop.f32.mrf.mxu0
        %v935 = vadd.f32 0.0, %v934
        %936 = vmatmul.f32.gmra.mxu0 %v585
        %v937 = vpop.f32.mrf.mxu0
        %v938 = vadd.f32 0.0, %v937
        %939 = vmatmul.f32.gmra.mxu0 %v588
        %v940 = vpop.f32.mrf.mxu0
        %v941 = vadd.f32 0.0, %v940
        %942 = vmatmul.f32.gmra.mxu0 %v591
        %v943 = vpop.f32.mrf.mxu0
        %v944 = vadd.f32 0.0, %v943
        %945 = vmatmul.f32.gmra.mxu0 %v594
        %v946 = vpop.f32.mrf.mxu0
        %v947 = vadd.f32 0.0, %v946
        %948 = vmatmul.f32.gmra.mxu0 %v597
        %v949 = vpop.f32.mrf.mxu0
        %v950 = vadd.f32 0.0, %v949
        %951 = vmatmul.f32.gmra.mxu0 %v600
        %v952 = vpop.f32.mrf.mxu0
        %v953 = vadd.f32 0.0, %v952
        %954 = vmatmul.f32.gmra.mxu0 %v603
        %v955 = vpop.f32.mrf.mxu0
        %v956 = vadd.f32 0.0, %v955
        %957 = vmatmul.f32.gmra.mxu0 %v606
        %v958 = vpop.f32.mrf.mxu0
        %v959 = vadd.f32 0.0, %v958
        %960 = vdwg.mxu0
        %v961 = vmul.f32 %v914, %v275
        %v962 = vmul.f32 %v917, %v276
        %v963 = vmul.f32 %v920, %v277
        %v964 = vmul.f32 %v923, %v278
        %v965 = vmul.f32 %v926, %v279
        %v966 = vmul.f32 %v929, %v280
        %v967 = vmul.f32 %v932, %v281
        %v968 = vmul.f32 %v935, %v282
        %v969 = vmul.f32 %v938, %v283
        %v970 = vmul.f32 %v941, %v284
        %v971 = vmul.f32 %v944, %v285
        %v972 = vmul.f32 %v947, %v286
        %v973 = vmul.f32 %v950, %v287
        %v974 = vmul.f32 %v953, %v288
        %v975 = vmul.f32 %v956, %v289
        %v976 = vmul.f32 %v959, %v290
        %977 = vmatpush.msra.mxu0 %v976
        %978 = vmatpush.msra.mxu0 %v975
        %979 = vmatpush.msra.mxu0 %v974
        %980 = vmatpush.msra.mxu0 %v973
        %981 = vmatpush.msra.mxu0 %v972
        %982 = vmatpush.msra.mxu0 %v971
        %983 = vmatpush.msra.mxu0 %v970
        %984 = vmatpush.msra.mxu0 %v969
        %985 = vmatpush.msra.mxu0 %v968
        %986 = vmatpush.msra.mxu0 %v967
        %987 = vmatpush.msra.mxu0 %v966
        %988 = vmatpush.msra.mxu0 %v965
        %989 = vmatpush.msra.mxu0 %v964
        %990 = vmatpush.msra.mxu0 %v963
        %991 = vmatpush.msra.mxu0 %v962
        %992 = vmatpush.msra.mxu0 %v961
        %993 = vmatmul.f32.gmra.mxu0 %v274
        %v994 = vpop.f32.mrf.mxu0
        %v995 = vadd.f32 0.0, %v994
        %996 = vdwg.mxu0
        %997 = vmatpush.msra.mxu0 %v751
        %998 = vmatpush.msra.mxu0 %v750
        %999 = vmatpush.msra.mxu0 %v749
        %1000 = vmatpush.msra.mxu0 %v748
        %1001 = vmatpush.msra.mxu0 %v747
        %1002 = vmatpush.msra.mxu0 %v746
        %1003 = vmatpush.msra.mxu0 %v745
        %1004 = vmatpush.msra.mxu0 %v744
        %1005 = vmatpush.msra.mxu0 %v743
        %1006 = vmatpush.msra.mxu0 %v742
        %1007 = vmatpush.msra.mxu0 %v741
        %1008 = vmatpush.msra.mxu0 %v740
        %1009 = vmatpush.msra.mxu0 %v739
        %1010 = vmatpush.msra.mxu0 %v738
        %1011 = vmatpush.msra.mxu0 %v737
        %1012 = vmatpush.msra.mxu0 %v736
        %1013 = vmatmul.f32.gmra.mxu0 %v995
        %v1014 = vpop.f32.mrf.mxu0
        %v1015 = vadd.f32 %v295, %v1014
        %1016 = vdwg.mxu0
        %1017 = vst [vmem:[%s218] sm:$0xf] %v1015
        %s1018 = scalar_lea.vmem %s223, 4
        %v1019 = vld [vmem:[%s1018] sm:$0xf]
        %v1021 = vsel %vm443, %v1019, 0
        %1023 = vmatpush.msra.mxu0 0.0
        %1024 = vmatpush.msra.mxu0 0.0
        %1025 = vmatpush.msra.mxu0 0.0
        %1026 = vmatpush.msra.mxu0 0.0
        %1027 = vmatpush.msra.mxu0 0.0
        %1028 = vmatpush.msra.mxu0 0.0
        %1029 = vmatpush.msra.mxu0 0.0
        %1030 = vmatpush.msra.mxu0 0.0
        %1031 = vmatpush.msra.mxu0 0.0
        %1032 = vmatpush.msra.mxu0 0.0
        %1033 = vmatpush.msra.mxu0 0.0
        %1034 = vmatpush.msra.mxu0 0.0
        %1035 = vmatpush.msra.mxu0 0.0
        %1036 = vmatpush.msra.mxu0 0.0
        %1037 = vmatpush.msra.mxu0 0.0
        %1038 = vmatpush.msra.mxu0 %v1021
        %1039 = vmatmul.f32.gmra.mxu0 %v300
        %v1040 = vpop.f32.mrf.mxu0
        %v1041 = vadd.f32 0.0, %v1040
        %1042 = vmatmul.f32.gmra.mxu0 %v303
        %v1043 = vpop.f32.mrf.mxu0
        %v1044 = vadd.f32 0.0, %v1043
        %1045 = vmatmul.f32.gmra.mxu0 %v306
        %v1046 = vpop.f32.mrf.mxu0
        %v1047 = vadd.f32 0.0, %v1046
        %1048 = vmatmul.f32.gmra.mxu0 %v309
        %v1049 = vpop.f32.mrf.mxu0
        %v1050 = vadd.f32 0.0, %v1049
        %1051 = vmatmul.f32.gmra.mxu0 %v312
        %v1052 = vpop.f32.mrf.mxu0
        %v1053 = vadd.f32 0.0, %v1052
        %1054 = vmatmul.f32.gmra.mxu0 %v315
        %v1055 = vpop.f32.mrf.mxu0
        %v1056 = vadd.f32 0.0, %v1055
        %1057 = vmatmul.f32.gmra.mxu0 %v318
        %v1058 = vpop.f32.mrf.mxu0
        %v1059 = vadd.f32 0.0, %v1058
        %1060 = vmatmul.f32.gmra.mxu0 %v321
        %v1061 = vpop.f32.mrf.mxu0
        %v1062 = vadd.f32 0.0, %v1061
        %1063 = vmatmul.f32.gmra.mxu0 %v324
        %v1064 = vpop.f32.mrf.mxu0
        %v1065 = vadd.f32 0.0, %v1064
        %1066 = vmatmul.f32.gmra.mxu0 %v327
        %v1067 = vpop.f32.mrf.mxu0
        %v1068 = vadd.f32 0.0, %v1067
        %1069 = vmatmul.f32.gmra.mxu0 %v330
        %v1070 = vpop.f32.mrf.mxu0
        %v1071 = vadd.f32 0.0, %v1070
        %1072 = vmatmul.f32.gmra.mxu0 %v333
        %v1073 = vpop.f32.mrf.mxu0
        %v1074 = vadd.f32 0.0, %v1073
        %1075 = vmatmul.f32.gmra.mxu0 %v336
        %v1076 = vpop.f32.mrf.mxu0
        %v1077 = vadd.f32 0.0, %v1076
        %1078 = vmatmul.f32.gmra.mxu0 %v339
        %v1079 = vpop.f32.mrf.mxu0
        %v1080 = vadd.f32 0.0, %v1079
        %1081 = vmatmul.f32.gmra.mxu0 %v342
        %v1082 = vpop.f32.mrf.mxu0
        %v1083 = vadd.f32 0.0, %v1082
        %1084 = vmatmul.f32.gmra.mxu0 %v345
        %v1085 = vpop.f32.mrf.mxu0
        %v1086 = vadd.f32 0.0, %v1085
        %1087 = vmatmul.f32.gmra.mxu0 %v348
        %v1088 = vpop.f32.mrf.mxu0
        %v1089 = vadd.f32 0.0, %v1088
        %1090 = vmatmul.f32.gmra.mxu0 %v351
        %v1091 = vpop.f32.mrf.mxu0
        %v1092 = vadd.f32 0.0, %v1091
        %1093 = vmatmul.f32.gmra.mxu0 %v354
        %v1094 = vpop.f32.mrf.mxu0
        %v1095 = vadd.f32 0.0, %v1094
        %1096 = vmatmul.f32.gmra.mxu0 %v357
        %v1097 = vpop.f32.mrf.mxu0
        %v1098 = vadd.f32 0.0, %v1097
        %1099 = vmatmul.f32.gmra.mxu0 %v360
        %v1100 = vpop.f32.mrf.mxu0
        %v1101 = vadd.f32 0.0, %v1100
        %1102 = vmatmul.f32.gmra.mxu0 %v363
        %v1103 = vpop.f32.mrf.mxu0
        %v1104 = vadd.f32 0.0, %v1103
        %1105 = vmatmul.f32.gmra.mxu0 %v366
        %v1106 = vpop.f32.mrf.mxu0
        %v1107 = vadd.f32 0.0, %v1106
        %1108 = vmatmul.f32.gmra.mxu0 %v369
        %v1109 = vpop.f32.mrf.mxu0
        %v1110 = vadd.f32 0.0, %v1109
        %1111 = vmatmul.f32.gmra.mxu0 %v372
        %v1112 = vpop.f32.mrf.mxu0
        %v1113 = vadd.f32 0.0, %v1112
        %1114 = vmatmul.f32.gmra.mxu0 %v375
        %v1115 = vpop.f32.mrf.mxu0
        %v1116 = vadd.f32 0.0, %v1115
        %1117 = vmatmul.f32.gmra.mxu0 %v378
        %v1118 = vpop.f32.mrf.mxu0
        %v1119 = vadd.f32 0.0, %v1118
        %1120 = vmatmul.f32.gmra.mxu0 %v381
        %v1121 = vpop.f32.mrf.mxu0
        %v1122 = vadd.f32 0.0, %v1121
        %1123 = vmatmul.f32.gmra.mxu0 %v384
        %v1124 = vpop.f32.mrf.mxu0
        %v1125 = vadd.f32 0.0, %v1124
        %1126 = vmatmul.f32.gmra.mxu0 %v387
        %v1127 = vpop.f32.mrf.mxu0
        %v1128 = vadd.f32 0.0, %v1127
        %1129 = vmatmul.f32.gmra.mxu0 %v390
        %v1130 = vpop.f32.mrf.mxu0
        %v1131 = vadd.f32 0.0, %v1130
        %1132 = vmatmul.f32.gmra.mxu0 %v393
        %v1133 = vpop.f32.mrf.mxu0
        %v1134 = vadd.f32 0.0, %v1133
        %1135 = vmatmul.f32.gmra.mxu0 %v396
        %v1136 = vpop.f32.mrf.mxu0
        %v1137 = vadd.f32 0.0, %v1136
        %1138 = vmatmul.f32.gmra.mxu0 %v399
        %v1139 = vpop.f32.mrf.mxu0
        %v1140 = vadd.f32 0.0, %v1139
        %1141 = vmatmul.f32.gmra.mxu0 %v402
        %v1142 = vpop.f32.mrf.mxu0
        %v1143 = vadd.f32 0.0, %v1142
        %1144 = vmatmul.f32.gmra.mxu0 %v405
        %v1145 = vpop.f32.mrf.mxu0
        %v1146 = vadd.f32 0.0, %v1145
        %1147 = vmatmul.f32.gmra.mxu0 %v408
        %v1148 = vpop.f32.mrf.mxu0
        %v1149 = vadd.f32 0.0, %v1148
        %1150 = vmatmul.f32.gmra.mxu0 %v411
        %v1151 = vpop.f32.mrf.mxu0
        %v1152 = vadd.f32 0.0, %v1151
        %1153 = vmatmul.f32.gmra.mxu0 %v414
        %v1154 = vpop.f32.mrf.mxu0
        %v1155 = vadd.f32 0.0, %v1154
        %1156 = vmatmul.f32.gmra.mxu0 %v417
        %v1157 = vpop.f32.mrf.mxu0
        %v1158 = vadd.f32 0.0, %v1157
        %1159 = vmatmul.f32.gmra.mxu0 %v420
        %v1160 = vpop.f32.mrf.mxu0
        %v1161 = vadd.f32 0.0, %v1160
        %1162 = vmatmul.f32.gmra.mxu0 %v423
        %v1163 = vpop.f32.mrf.mxu0
        %v1164 = vadd.f32 0.0, %v1163
        %1165 = vmatmul.f32.gmra.mxu0 %v426
        %v1166 = vpop.f32.mrf.mxu0
        %v1167 = vadd.f32 0.0, %v1166
        %1168 = vmatmul.f32.gmra.mxu0 %v429
        %v1169 = vpop.f32.mrf.mxu0
        %v1170 = vadd.f32 0.0, %v1169
        %1171 = vmatmul.f32.gmra.mxu0 %v432
        %v1172 = vpop.f32.mrf.mxu0
        %v1173 = vadd.f32 0.0, %v1172
        %1174 = vmatmul.f32.gmra.mxu0 %v435
        %v1175 = vpop.f32.mrf.mxu0
        %v1176 = vadd.f32 0.0, %v1175
        %1177 = vmatmul.f32.gmra.mxu0 %v438
        %v1178 = vpop.f32.mrf.mxu0
        %v1179 = vadd.f32 0.0, %v1178
        %1180 = vmatmul.f32.gmra.mxu0 %v441
        %v1181 = vpop.f32.mrf.mxu0
        %v1182 = vadd.f32 0.0, %v1181
        %1183 = vdwg.mxu0
        %v1184 = vmax.f32 %v1041, %v1044
        %v1185 = vmax.f32 %v1184, %v1047
        %v1186 = vmax.f32 %v1185, %v1050
        %v1187 = vrot.slane %v1186, 4
        %v1188 = vmax.f32 %v1186, %v1187
        %v1189 = vrot.slane %v1188, 2
        %v1190 = vmax.f32 %v1188, %v1189
        %v1191 = vrot.slane %v1190, 1
        %v1192 = vmax.f32 %v1190, %v1191
        %v1193 = vmax.f32 %v1053, %v1056
        %v1194 = vmax.f32 %v1193, %v1059
        %v1195 = vmax.f32 %v1194, %v1062
        %v1196 = vrot.slane %v1195, 4
        %v1197 = vmax.f32 %v1195, %v1196
        %v1198 = vrot.slane %v1197, 2
        %v1199 = vmax.f32 %v1197, %v1198
        %v1200 = vrot.slane %v1199, 1
        %v1201 = vmax.f32 %v1199, %v1200
        %v1202 = vmax.f32 %v1065, %v1068
        %v1203 = vmax.f32 %v1202, %v1071
        %v1204 = vmax.f32 %v1203, %v1074
        %v1205 = vrot.slane %v1204, 4
        %v1206 = vmax.f32 %v1204, %v1205
        %v1207 = vrot.slane %v1206, 2
        %v1208 = vmax.f32 %v1206, %v1207
        %v1209 = vrot.slane %v1208, 1
        %v1210 = vmax.f32 %v1208, %v1209
        %v1211 = vmax.f32 %v1077, %v1080
        %v1212 = vmax.f32 %v1211, %v1083
        %v1213 = vmax.f32 %v1212, %v1086
        %v1214 = vrot.slane %v1213, 4
        %v1215 = vmax.f32 %v1213, %v1214
        %v1216 = vrot.slane %v1215, 2
        %v1217 = vmax.f32 %v1215, %v1216
        %v1218 = vrot.slane %v1217, 1
        %v1219 = vmax.f32 %v1217, %v1218
        %v1220 = vsub.f32 %v1041, %v1192
        %v1221 = vsub.f32 %v1044, %v1192
        %v1222 = vsub.f32 %v1047, %v1192
        %v1223 = vsub.f32 %v1050, %v1192
        %v1224 = vsub.f32 %v1053, %v1201
        %v1225 = vsub.f32 %v1056, %v1201
        %v1226 = vsub.f32 %v1059, %v1201
        %v1227 = vsub.f32 %v1062, %v1201
        %v1228 = vsub.f32 %v1065, %v1210
        %v1229 = vsub.f32 %v1068, %v1210
        %v1230 = vsub.f32 %v1071, %v1210
        %v1231 = vsub.f32 %v1074, %v1210
        %v1232 = vsub.f32 %v1077, %v1219
        %v1233 = vsub.f32 %v1080, %v1219
        %v1234 = vsub.f32 %v1083, %v1219
        %v1235 = vsub.f32 %v1086, %v1219
        %v1236 = vmul.f32 %v1220, 1.442695
        %v1237 = vpow.pop %v1236
        %v1238 = vmul.f32 %v1221, 1.442695
        %v1239 = vpow.pop %v1238
        %v1240 = vmul.f32 %v1222, 1.442695
        %v1241 = vpow.pop %v1240
        %v1242 = vmul.f32 %v1223, 1.442695
        %v1243 = vpow.pop %v1242
        %v1244 = vmul.f32 %v1224, 1.442695
        %v1245 = vpow.pop %v1244
        %v1246 = vmul.f32 %v1225, 1.442695
        %v1247 = vpow.pop %v1246
        %v1248 = vmul.f32 %v1226, 1.442695
        %v1249 = vpow.pop %v1248
        %v1250 = vmul.f32 %v1227, 1.442695
        %v1251 = vpow.pop %v1250
        %v1252 = vmul.f32 %v1228, 1.442695
        %v1253 = vpow.pop %v1252
        %v1254 = vmul.f32 %v1229, 1.442695
        %v1255 = vpow.pop %v1254
        %v1256 = vmul.f32 %v1230, 1.442695
        %v1257 = vpow.pop %v1256
        %v1258 = vmul.f32 %v1231, 1.442695
        %v1259 = vpow.pop %v1258
        %v1260 = vmul.f32 %v1232, 1.442695
        %v1261 = vpow.pop %v1260
        %v1262 = vmul.f32 %v1233, 1.442695
        %v1263 = vpow.pop %v1262
        %v1264 = vmul.f32 %v1234, 1.442695
        %v1265 = vpow.pop %v1264
        %v1266 = vmul.f32 %v1235, 1.442695
        %v1267 = vpow.pop %v1266
        %v1268 = vadd.f32 %v1237, %v1239
        %v1269 = vadd.f32 %v1268, %v1241
        %v1270 = vadd.f32 %v1269, %v1243
        %v1271 = vrot.slane %v1270, 4
        %v1272 = vadd.f32 %v1270, %v1271
        %v1273 = vrot.slane %v1272, 2
        %v1274 = vadd.f32 %v1272, %v1273
        %v1275 = vrot.slane %v1274, 1
        %v1276 = vadd.f32 %v1274, %v1275
        %v1277 = vadd.f32 %v1245, %v1247
        %v1278 = vadd.f32 %v1277, %v1249
        %v1279 = vadd.f32 %v1278, %v1251
        %v1280 = vrot.slane %v1279, 4
        %v1281 = vadd.f32 %v1279, %v1280
        %v1282 = vrot.slane %v1281, 2
        %v1283 = vadd.f32 %v1281, %v1282
        %v1284 = vrot.slane %v1283, 1
        %v1285 = vadd.f32 %v1283, %v1284
        %v1286 = vadd.f32 %v1253, %v1255
        %v1287 = vadd.f32 %v1286, %v1257
        %v1288 = vadd.f32 %v1287, %v1259
        %v1289 = vrot.slane %v1288, 4
        %v1290 = vadd.f32 %v1288, %v1289
        %v1291 = vrot.slane %v1290, 2
        %v1292 = vadd.f32 %v1290, %v1291
        %v1293 = vrot.slane %v1292, 1
        %v1294 = vadd.f32 %v1292, %v1293
        %v1295 = vadd.f32 %v1261, %v1263
        %v1296 = vadd.f32 %v1295, %v1265
        %v1297 = vadd.f32 %v1296, %v1267
        %v1298 = vrot.slane %v1297, 4
        %v1299 = vadd.f32 %v1297, %v1298
        %v1300 = vrot.slane %v1299, 2
        %v1301 = vadd.f32 %v1299, %v1300
        %v1302 = vrot.slane %v1301, 1
        %v1303 = vadd.f32 %v1301, %v1302
        %v1304 = vrcp.pop %v1276
        %v1305 = vrcp.pop %v1285
        %v1306 = vrcp.pop %v1294
        %v1307 = vrcp.pop %v1303
        %v1308 = vmul.f32 %v1304, 0.17677669
        %v1309 = vmul.f32 %v1305, 0.17677669
        %v1310 = vmul.f32 %v1306, 0.17677669
        %v1311 = vmul.f32 %v1307, 0.17677669
        %v1312 = vmul.f32 %v1237, %v1308
        %v1313 = vmul.f32 %v1239, %v1308
        %v1314 = vmul.f32 %v1241, %v1308
        %v1315 = vmul.f32 %v1243, %v1308
        %v1316 = vmul.f32 %v1245, %v1309
        %v1317 = vmul.f32 %v1247, %v1309
        %v1318 = vmul.f32 %v1249, %v1309
        %v1319 = vmul.f32 %v1251, %v1309
        %v1320 = vmul.f32 %v1253, %v1310
        %v1321 = vmul.f32 %v1255, %v1310
        %v1322 = vmul.f32 %v1257, %v1310
        %v1323 = vmul.f32 %v1259, %v1310
        %v1324 = vmul.f32 %v1261, %v1311
        %v1325 = vmul.f32 %v1263, %v1311
        %v1326 = vmul.f32 %v1265, %v1311
        %v1327 = vmul.f32 %v1267, %v1311
        %1328 = vmax.xlane.f32.xlu0 %v1089
        %v1329 = vpop.xlane.xlu0 %1328
        %1330 = vmax.xlane.f32.xlu0 %v1092
        %v1331 = vpop.xlane.xlu0 %1330
        %1332 = vmax.xlane.f32.xlu0 %v1095
        %v1333 = vpop.xlane.xlu0 %1332
        %1334 = vmax.xlane.f32.xlu0 %v1098
        %v1335 = vpop.xlane.xlu0 %1334
        %1336 = vmax.xlane.f32.xlu0 %v1101
        %v1337 = vpop.xlane.xlu0 %1336
        %1338 = vmax.xlane.f32.xlu0 %v1104
        %v1339 = vpop.xlane.xlu0 %1338
        %1340 = vmax.xlane.f32.xlu0 %v1107
        %v1341 = vpop.xlane.xlu0 %1340
        %1342 = vmax.xlane.f32.xlu0 %v1110
        %v1343 = vpop.xlane.xlu0 %1342
        %1344 = vmax.xlane.f32.xlu0 %v1113
        %v1345 = vpop.xlane.xlu0 %1344
        %1346 = vmax.xlane.f32.xlu0 %v1116
        %v1347 = vpop.xlane.xlu0 %1346
        %1348 = vmax.xlane.f32.xlu0 %v1119
        %v1349 = vpop.xlane.xlu0 %1348
        %1350 = vmax.xlane.f32.xlu0 %v1122
        %v1351 = vpop.xlane.xlu0 %1350
        %1352 = vmax.xlane.f32.xlu0 %v1125
        %v1353 = vpop.xlane.xlu0 %1352
        %1354 = vmax.xlane.f32.xlu0 %v1128
        %v1355 = vpop.xlane.xlu0 %1354
        %1356 = vmax.xlane.f32.xlu0 %v1131
        %v1357 = vpop.xlane.xlu0 %1356
        %1358 = vmax.xlane.f32.xlu0 %v1134
        %v1359 = vpop.xlane.xlu0 %1358
        %v1360 = vsub.f32 %v1089, %v1329
        %v1361 = vsub.f32 %v1092, %v1331
        %v1362 = vsub.f32 %v1095, %v1333
        %v1363 = vsub.f32 %v1098, %v1335
        %v1364 = vsub.f32 %v1101, %v1337
        %v1365 = vsub.f32 %v1104, %v1339
        %v1366 = vsub.f32 %v1107, %v1341
        %v1367 = vsub.f32 %v1110, %v1343
        %v1368 = vsub.f32 %v1113, %v1345
        %v1369 = vsub.f32 %v1116, %v1347
        %v1370 = vsub.f32 %v1119, %v1349
        %v1371 = vsub.f32 %v1122, %v1351
        %v1372 = vsub.f32 %v1125, %v1353
        %v1373 = vsub.f32 %v1128, %v1355
        %v1374 = vsub.f32 %v1131, %v1357
        %v1375 = vsub.f32 %v1134, %v1359
        %v1376 = vmul.f32 %v1360, 1.442695
        %v1377 = vpow.pop %v1376
        %v1378 = vmul.f32 %v1361, 1.442695
        %v1379 = vpow.pop %v1378
        %v1380 = vmul.f32 %v1362, 1.442695
        %v1381 = vpow.pop %v1380
        %v1382 = vmul.f32 %v1363, 1.442695
        %v1383 = vpow.pop %v1382
        %v1384 = vmul.f32 %v1364, 1.442695
        %v1385 = vpow.pop %v1384
        %v1386 = vmul.f32 %v1365, 1.442695
        %v1387 = vpow.pop %v1386
        %v1388 = vmul.f32 %v1366, 1.442695
        %v1389 = vpow.pop %v1388
        %v1390 = vmul.f32 %v1367, 1.442695
        %v1391 = vpow.pop %v1390
        %v1392 = vmul.f32 %v1368, 1.442695
        %v1393 = vpow.pop %v1392
        %v1394 = vmul.f32 %v1369, 1.442695
        %v1395 = vpow.pop %v1394
        %v1396 = vmul.f32 %v1370, 1.442695
        %v1397 = vpow.pop %v1396
        %v1398 = vmul.f32 %v1371, 1.442695
        %v1399 = vpow.pop %v1398
        %v1400 = vmul.f32 %v1372, 1.442695
        %v1401 = vpow.pop %v1400
        %v1402 = vmul.f32 %v1373, 1.442695
        %v1403 = vpow.pop %v1402
        %v1404 = vmul.f32 %v1374, 1.442695
        %v1405 = vpow.pop %v1404
        %v1406 = vmul.f32 %v1375, 1.442695
        %v1407 = vpow.pop %v1406
        %1408 = vadd.xlane.f32.xlu0 %v1377
        %v1409 = vpop.xlane.xlu0 %1408
        %1410 = vadd.xlane.f32.xlu0 %v1379
        %v1411 = vpop.xlane.xlu0 %1410
        %1412 = vadd.xlane.f32.xlu0 %v1381
        %v1413 = vpop.xlane.xlu0 %1412
        %1414 = vadd.xlane.f32.xlu0 %v1383
        %v1415 = vpop.xlane.xlu0 %1414
        %1416 = vadd.xlane.f32.xlu0 %v1385
        %v1417 = vpop.xlane.xlu0 %1416
        %1418 = vadd.xlane.f32.xlu0 %v1387
        %v1419 = vpop.xlane.xlu0 %1418
        %1420 = vadd.xlane.f32.xlu0 %v1389
        %v1421 = vpop.xlane.xlu0 %1420
        %1422 = vadd.xlane.f32.xlu0 %v1391
        %v1423 = vpop.xlane.xlu0 %1422
        %1424 = vadd.xlane.f32.xlu0 %v1393
        %v1425 = vpop.xlane.xlu0 %1424
        %1426 = vadd.xlane.f32.xlu0 %v1395
        %v1427 = vpop.xlane.xlu0 %1426
        %1428 = vadd.xlane.f32.xlu0 %v1397
        %v1429 = vpop.xlane.xlu0 %1428
        %1430 = vadd.xlane.f32.xlu0 %v1399
        %v1431 = vpop.xlane.xlu0 %1430
        %1432 = vadd.xlane.f32.xlu0 %v1401
        %v1433 = vpop.xlane.xlu0 %1432
        %1434 = vadd.xlane.f32.xlu0 %v1403
        %v1435 = vpop.xlane.xlu0 %1434
        %1436 = vadd.xlane.f32.xlu0 %v1405
        %v1437 = vpop.xlane.xlu0 %1436
        %1438 = vadd.xlane.f32.xlu0 %v1407
        %v1439 = vpop.xlane.xlu0 %1438
        %v1440 = vrcp.pop %v1409
        %v1441 = vrcp.pop %v1411
        %v1442 = vrcp.pop %v1413
        %v1443 = vrcp.pop %v1415
        %v1444 = vrcp.pop %v1417
        %v1445 = vrcp.pop %v1419
        %v1446 = vrcp.pop %v1421
        %v1447 = vrcp.pop %v1423
        %v1448 = vrcp.pop %v1425
        %v1449 = vrcp.pop %v1427
        %v1450 = vrcp.pop %v1429
        %v1451 = vrcp.pop %v1431
        %v1452 = vrcp.pop %v1433
        %v1453 = vrcp.pop %v1435
        %v1454 = vrcp.pop %v1437
        %v1455 = vrcp.pop %v1439
        %v1456 = vmul.f32 %v1377, %v1440
        %v1457 = vmul.f32 %v1379, %v1441
        %v1458 = vmul.f32 %v1381, %v1442
        %v1459 = vmul.f32 %v1383, %v1443
        %v1460 = vmul.f32 %v1385, %v1444
        %v1461 = vmul.f32 %v1387, %v1445
        %v1462 = vmul.f32 %v1389, %v1446
        %v1463 = vmul.f32 %v1391, %v1447
        %v1464 = vmul.f32 %v1393, %v1448
        %v1465 = vmul.f32 %v1395, %v1449
        %v1466 = vmul.f32 %v1397, %v1450
        %v1467 = vmul.f32 %v1399, %v1451
        %v1468 = vmul.f32 %v1401, %v1452
        %v1469 = vmul.f32 %v1403, %v1453
        %v1470 = vmul.f32 %v1405, %v1454
        %v1471 = vmul.f32 %v1407, %v1455
        %1472 = vmatpush.xpose.msra.mxu0 %v1471
        %1473 = vmatpush.xpose.msra.mxu0 %v1470
        %1474 = vmatpush.xpose.msra.mxu0 %v1469
        %1475 = vmatpush.xpose.msra.mxu0 %v1468
        %1476 = vmatpush.xpose.msra.mxu0 %v1467
        %1477 = vmatpush.xpose.msra.mxu0 %v1466
        %1478 = vmatpush.xpose.msra.mxu0 %v1465
        %1479 = vmatpush.xpose.msra.mxu0 %v1464
        %1480 = vmatpush.xpose.msra.mxu0 %v1463
        %1481 = vmatpush.xpose.msra.mxu0 %v1462
        %1482 = vmatpush.xpose.msra.mxu0 %v1461
        %1483 = vmatpush.xpose.msra.mxu0 %v1460
        %1484 = vmatpush.xpose.msra.mxu0 %v1459
        %1485 = vmatpush.xpose.msra.mxu0 %v1458
        %1486 = vmatpush.xpose.msra.mxu0 %v1457
        %1487 = vmatpush.xpose.msra.mxu0 %v1456
        %1488 = vmatmul.f32.gmra.mxu0 %v1137
        %v1489 = vpop.f32.mrf.mxu0
        %v1490 = vadd.f32 0.0, %v1489
        %1491 = vmatmul.f32.gmra.mxu0 %v1140
        %v1492 = vpop.f32.mrf.mxu0
        %v1493 = vadd.f32 0.0, %v1492
        %1494 = vmatmul.f32.gmra.mxu0 %v1143
        %v1495 = vpop.f32.mrf.mxu0
        %v1496 = vadd.f32 0.0, %v1495
        %1497 = vmatmul.f32.gmra.mxu0 %v1146
        %v1498 = vpop.f32.mrf.mxu0
        %v1499 = vadd.f32 0.0, %v1498
        %1500 = vmatmul.f32.gmra.mxu0 %v1149
        %v1501 = vpop.f32.mrf.mxu0
        %v1502 = vadd.f32 0.0, %v1501
        %1503 = vmatmul.f32.gmra.mxu0 %v1152
        %v1504 = vpop.f32.mrf.mxu0
        %v1505 = vadd.f32 0.0, %v1504
        %1506 = vmatmul.f32.gmra.mxu0 %v1155
        %v1507 = vpop.f32.mrf.mxu0
        %v1508 = vadd.f32 0.0, %v1507
        %1509 = vmatmul.f32.gmra.mxu0 %v1158
        %v1510 = vpop.f32.mrf.mxu0
        %v1511 = vadd.f32 0.0, %v1510
        %1512 = vmatmul.f32.gmra.mxu0 %v1161
        %v1513 = vpop.f32.mrf.mxu0
        %v1514 = vadd.f32 0.0, %v1513
        %1515 = vmatmul.f32.gmra.mxu0 %v1164
        %v1516 = vpop.f32.mrf.mxu0
        %v1517 = vadd.f32 0.0, %v1516
        %1518 = vmatmul.f32.gmra.mxu0 %v1167
        %v1519 = vpop.f32.mrf.mxu0
        %v1520 = vadd.f32 0.0, %v1519
        %1521 = vmatmul.f32.gmra.mxu0 %v1170
        %v1522 = vpop.f32.mrf.mxu0
        %v1523 = vadd.f32 0.0, %v1522
        %1524 = vmatmul.f32.gmra.mxu0 %v1173
        %v1525 = vpop.f32.mrf.mxu0
        %v1526 = vadd.f32 0.0, %v1525
        %1527 = vmatmul.f32.gmra.mxu0 %v1176
        %v1528 = vpop.f32.mrf.mxu0
        %v1529 = vadd.f32 0.0, %v1528
        %1530 = vmatmul.f32.gmra.mxu0 %v1179
        %v1531 = vpop.f32.mrf.mxu0
        %v1532 = vadd.f32 0.0, %v1531
        %1533 = vmatmul.f32.gmra.mxu0 %v1182
        %v1534 = vpop.f32.mrf.mxu0
        %v1535 = vadd.f32 0.0, %v1534
        %1536 = vdwg.mxu0
        %v1537 = vmul.f32 %v1490, %v275
        %v1538 = vmul.f32 %v1493, %v276
        %v1539 = vmul.f32 %v1496, %v277
        %v1540 = vmul.f32 %v1499, %v278
        %v1541 = vmul.f32 %v1502, %v279
        %v1542 = vmul.f32 %v1505, %v280
        %v1543 = vmul.f32 %v1508, %v281
        %v1544 = vmul.f32 %v1511, %v282
        %v1545 = vmul.f32 %v1514, %v283
        %v1546 = vmul.f32 %v1517, %v284
        %v1547 = vmul.f32 %v1520, %v285
        %v1548 = vmul.f32 %v1523, %v286
        %v1549 = vmul.f32 %v1526, %v287
        %v1550 = vmul.f32 %v1529, %v288
        %v1551 = vmul.f32 %v1532, %v289
        %v1552 = vmul.f32 %v1535, %v290
        %1553 = vmatpush.msra.mxu0 %v1552
        %1554 = vmatpush.msra.mxu0 %v1551
        %1555 = vmatpush.msra.mxu0 %v1550
        %1556 = vmatpush.msra.mxu0 %v1549
        %1557 = vmatpush.msra.mxu0 %v1548
        %1558 = vmatpush.msra.mxu0 %v1547
        %1559 = vmatpush.msra.mxu0 %v1546
        %1560 = vmatpush.msra.mxu0 %v1545
        %1561 = vmatpush.msra.mxu0 %v1544
        %1562 = vmatpush.msra.mxu0 %v1543
        %1563 = vmatpush.msra.mxu0 %v1542
        %1564 = vmatpush.msra.mxu0 %v1541
        %1565 = vmatpush.msra.mxu0 %v1540
        %1566 = vmatpush.msra.mxu0 %v1539
        %1567 = vmatpush.msra.mxu0 %v1538
        %1568 = vmatpush.msra.mxu0 %v1537
        %1569 = vmatmul.f32.gmra.mxu0 %v274
        %v1570 = vpop.f32.mrf.mxu0
        %v1571 = vadd.f32 0.0, %v1570
        %1572 = vdwg.mxu0
        %1573 = vmatpush.msra.mxu0 %v1327
        %1574 = vmatpush.msra.mxu0 %v1326
        %1575 = vmatpush.msra.mxu0 %v1325
        %1576 = vmatpush.msra.mxu0 %v1324
        %1577 = vmatpush.msra.mxu0 %v1323
        %1578 = vmatpush.msra.mxu0 %v1322
        %1579 = vmatpush.msra.mxu0 %v1321
        %1580 = vmatpush.msra.mxu0 %v1320
        %1581 = vmatpush.msra.mxu0 %v1319
        %1582 = vmatpush.msra.mxu0 %v1318
        %1583 = vmatpush.msra.mxu0 %v1317
        %1584 = vmatpush.msra.mxu0 %v1316
        %1585 = vmatpush.msra.mxu0 %v1315
        %1586 = vmatpush.msra.mxu0 %v1314
        %1587 = vmatpush.msra.mxu0 %v1313
        %1588 = vmatpush.msra.mxu0 %v1312
        %1589 = vmatmul.f32.gmra.mxu0 %v1571
        %v1590 = vpop.f32.mrf.mxu0
        %v1591 = vadd.f32 %v295, %v1590
        %1592 = vdwg.mxu0
        %s1593 = scalar_lea.vmem %s218, 4 [#allocation2]
        %1594 = vst [vmem:[%s1593] sm:$0xf] %v1591
        %s1595 = sand.u32 %s137, 1
        %s1596 = scalar_lea.sflag [#allocation3], %s1595
        %s1597 = sand.u32 %s137, 1
        %s1598 = smul.addr %s1597, 8
        %s1599 = scalar_lea.vmem [#allocation2], %s1598
        // Predicated region
        $region41: #{tpu_custom_call.1} parent=39 // pred_check
          %p1600 = pneg %p147
        $region42: #{tpu_custom_call.1} parent=39 // pred_check_branch
          %1602 = sbr.rel (%p1600) target = $region44
        $region43: #{tpu_custom_call.1} parent=39 // pred_region
          %s1603 = smul.u32 2, %s19
          %1605 = vsyncadd %s1596, 0
          %s1606 = smul.addr %s1603, 4
          %s1607 = scalar_lea.hbm %s5, %s1606
          %s1608 = sshll.u32 %s1599, 4
          %s1609 = int_to_ptr.vmem [resolvable:$true] %s1608
          %s1610 = sshll.u32 %s1607, 4
          %s1611 = int_to_ptr.hbm [resolvable:$true] %s1610
          %1616 = dma.vmem_to_hbm [thread:$0]  %s1609, 128, %s1611, %s1596, 64, 64, 4
        $region44: #{tpu_custom_call.1} parent=39 // pred_fallthru
          _
      $region40: #{tpu_custom_call.1} parent=5 // pred_fallthru
        _
      %p1617 = scmp.le.s32.totalorder 2, %s14
      // Predicated region
      $region45: #{tpu_custom_call.1} parent=5 // pred_check
        %p1618 = pneg %p1617
      $region46: #{tpu_custom_call.1} parent=5 // pred_check_branch
        %1620 = sbr.rel (%p1618) target = $region48
      $region47: #{tpu_custom_call.1} parent=5 // pred_region
        %s1621 = ssub.s32 %s14, 2
        // Predicated region
        $region49: #{tpu_custom_call.1} parent=47 // pred_check
          %p1622 = pneg %p153
        $region50: #{tpu_custom_call.1} parent=47 // pred_check_branch
          %1624 = sbr.rel (%p1622) target = $region52
        $region51: #{tpu_custom_call.1} parent=47 // pred_region
          %s1625 = sand.u32 %s138, 1
          %s1626 = scalar_lea.sflag [#allocation3], %s1625
          %s1627 = sand.u32 %s138, 1
          %s1628 = smul.addr %s1627, 8
          %s1629 = scalar_lea.vmem [#allocation2], %s1628
          %1631 = dma.done %s1626, 128
        $region52: #{tpu_custom_call.1} parent=47 // pred_fallthru
          _
      $region48: #{tpu_custom_call.1} parent=5 // pred_fallthru
        _
    $region6: #{tpu_custom_call.1} parent=1 // loop_footer
      %s18 = sadd.s32 1, %s14
    $region7: #{tpu_custom_call.1} parent=1 // loop_footer_branch
      %13 = sbr.rel target = $region3
    $region8: #{tpu_custom_call.1} parent=1 // loop_exit
      _
    %1632 = vsyncpa [#allocation3], 1
    %s1633 = scalar_lea.sflag [#allocation3], 1
    %1634 = vsyncpa %s1633, 1

</llo_original>
